<compile_context>
chip_gen: v5e
topology: v5e:2x2
jax: 0.10.0
libtpu: 0.0.40
codegen_flags: <defaults>
</compile_context>

<pallas_src>
import functools

import jax
import jax.numpy as jnp
from jax.experimental import pallas as pl
from jax.experimental.pallas import tpu as pltpu


def _rfem_kernel(H, W,
                 x_ref, hh_ref, ww_ref,
                 w1_ref, b1_ref, w2_ref, b2_ref, s3_ref, b3_ref,
                 o_ref):
    """RFEM forward for the whole (folded) batch in one grid step.

    Layout: channels on sublanes, batch*spatial flattened on the lane axis.
      x_ref : (C1, L)  f32, L = N*H*W (lane-dense: L multiple of 128)
      hh/ww : (1, L)   i32, row / col coordinate of each lane position
      w1_ref: (C1, C_, 1)    1x1 weights, BN1 scale pre-folded
      b1_ref: (C_, 1)        BN1 shift
      w2_ref: (9, C_, C2, 1) 3x3 weights (tap-major), BN2 scale pre-folded
      b2_ref: (C2, 1)        BN2 shift
      s3/b3 : (C2, 1)        final BN affine
      o_ref : (C2, L)
    """
    C1, L = x_ref.shape
    C_ = w1_ref.shape[1]
    C2 = w2_ref.shape[2]

    x = x_ref[...]                                     # (C1, L) f32
    hh = hh_ref[...]                                   # (1, L) int32
    ww = ww_ref[...]                                   # (1, L) int32
    w1 = w1_ref[...]                                   # (C1, C_, 1) loaded once
    w2 = w2_ref[...]                                   # (9, C_, C2, 1) loaded once
    b1 = b1_ref[...]                                   # (C_, 1)
    b2 = b2_ref[...]                                   # (C2, 1)

    # ---- shared 1x1 conv + BN1 + SiLU (VPU broadcast FMAs, no MXU) ----
    y = jnp.zeros((C_, L), jnp.float32)
    for c1 in range(C1):
        y = y + w1[c1] * x[c1:c1 + 1, :]               # (C_,1)*(1,L) -> (C_,L)
    y = y + b1
    y = y * jax.nn.sigmoid(y)                          # SiLU

    # Border-validity masks, hoisted: computed once per offset magnitude and
    # reused by every tap / dilation that needs them.
    row_ok = {0: None}
    col_ok = {0: None}
    for d in (1, 2, 3):
        row_ok[-d] = hh - d >= 0
        row_ok[d] = hh + d < H
        col_ok[-d] = ww - d >= 0
        col_ok[d] = ww + d < W

    # "shift y by (dy, dx) with zero padding" = lane roll + border mask.
    # A 2-D shift on the flattened H*W axis is a 1-D roll; positions whose
    # source (h+dy, w+dx) falls outside the image (including row / batch
    # wrap-around) are masked to zero, which reproduces conv2d zero padding.
    def shifted(dy, dx):
        s = dy * W + dx
        rolled = y if s == 0 else pltpu.roll(y, shift=(-s) % L, axis=1)
        r = row_ok[dy]
        c = col_ok[dx]
        if r is None and c is None:
            return rolled
        valid = r if c is None else (c if r is None else jnp.logical_and(r, c))
        return jnp.where(valid, rolled, 0.0)           # (C_, L)

    # Center-tap contribution is identical for the three dilation branches
    # (the 3x3 weights are shared), so compute it once.  Fold in BN2 shift and
    # the residual as well.
    center = jnp.zeros((C2, L), jnp.float32)
    for ci in range(C_):
        center = center + w2[4, ci] * y[ci:ci + 1, :]
    base = center + b2 + x                             # (C2, L); C1 == C2

    acc = jnp.zeros((C2, L), jnp.float32)
    for d in (1, 2, 3):                # dilation == padding -> "same" output
        conv = base
        for ky in range(3):
            for kx in range(3):
                if ky == 1 and kx == 1:
                    continue                           # center tap already in `base`
                ysh = shifted((ky - 1) * d, (kx - 1) * d)      # (C_, L)
                t = ky * 3 + kx
                for ci in range(C_):
                    # (C2,1) * (1,L) broadcast FMA on the VPU
                    conv = conv + w2[t, ci] * ysh[ci:ci + 1, :]
        acc = acc + conv * jax.nn.sigmoid(conv)        # SiLU, sum the three branches

    # ---- RFEM head: branches + input, BN, SiLU ----
    total = acc + x
    out = total * s3_ref[...] + b3_ref[...]
    o_ref[...] = (out * jax.nn.sigmoid(out)).astype(o_ref.dtype)


@jax.jit
def rfem_pallas(x_nchw, w1_torch, w2_torch, s1, b1, s2, b2, s3, b3):
    """x_nchw: (N, C1, H, W). Conv weights in PyTorch layout. Returns (N, C2, H, W)."""
    N, C1, H, W = x_nchw.shape
    C_ = w1_torch.shape[0]
    C2 = w2_torch.shape[0]
    assert C1 == C2, "RFEM residual add requires c1 == c2 (and stride == 1)"
    L = N * H * W

    # Lane-dense layout: channels -> sublanes, batch*spatial -> lanes.
    x_flat = jnp.transpose(x_nchw, (1, 0, 2, 3)).reshape(C1, L).astype(jnp.float32)

    # Per-lane (h, w) coordinates for in-kernel border masking.
    p = jnp.arange(L, dtype=jnp.int32) % (H * W)
    hh = (p // W).reshape(1, L)
    ww = (p % W).reshape(1, L)

    # Fold BN scales into conv weights (wrapper-side, one-time cost).
    w1_cols = jnp.transpose(w1_torch[:, :, 0, 0] * s1[:, None], (1, 0))[..., None]  # (C1, C_, 1)
    w2_cols = jnp.transpose(w2_torch * s2[:, None, None, None], (2, 3, 1, 0))       # (3,3,C_,C2)
    w2_cols = w2_cols.reshape(9, C_, C2, 1)                                          # tap-major
    b1c = b1.reshape(C_, 1).astype(jnp.float32)
    b2c = b2.reshape(C2, 1).astype(jnp.float32)
    s3c = s3.reshape(C2, 1).astype(jnp.float32)
    b3c = b3.reshape(C2, 1).astype(jnp.float32)

    kernel = functools.partial(_rfem_kernel, H, W)
    out_flat = pl.pallas_call(
        kernel,
        out_shape=jax.ShapeDtypeStruct((C2, L), jnp.float32),
        grid=(1,),
        in_specs=[
            pl.BlockSpec((C1, L), lambda i: (0, 0)),
            pl.BlockSpec((1, L), lambda i: (0, 0)),
            pl.BlockSpec((1, L), lambda i: (0, 0)),
            pl.BlockSpec((C1, C_, 1), lambda i: (0, 0, 0)),
            pl.BlockSpec((C_, 1), lambda i: (0, 0)),
            pl.BlockSpec((9, C_, C2, 1), lambda i: (0, 0, 0, 0)),
            pl.BlockSpec((C2, 1), lambda i: (0, 0)),
            pl.BlockSpec((C2, 1), lambda i: (0, 0)),
            pl.BlockSpec((C2, 1), lambda i: (0, 0)),
        ],
        out_specs=pl.BlockSpec((C2, L), lambda i: (0, 0)),
        compiler_params=pltpu.CompilerParams(
            dimension_semantics=("arbitrary",)),
    )(x_flat, hh, ww, w1_cols.astype(jnp.float32), b1c,
      w2_cols.astype(jnp.float32), b2c, s3c, b3c)

    return jnp.transpose(out_flat.reshape(C2, N, H, W), (1, 0, 2, 3))


def rfem_reference(x_nhwc, w1_torch, w2_torch, s1, b1, s2, b2, s3, b3):
    """Pure-JAX reference (lax conv, un-folded BN) of the same forward pass."""
    w1_mat = jnp.transpose(w1_torch[:, :, 0, 0], (1, 0))      # (C1, C_)
    w2_hwio = jnp.transpose(w2_torch, (2, 3, 1, 0))           # (3, 3, C_, C2)
    y = jnp.einsum('nhwc,cd->nhwd', x_nhwc, w1_mat)
    y = jax.nn.silu(y * s1 + b1)
    total = x_nhwc
    for d in (1, 2, 3):
        conv = jax.lax.conv_general_dilated(
            y, w2_hwio, window_strides=(1, 1),
            padding=[(d, d), (d, d)], rhs_dilation=(d, d),
            dimension_numbers=('NHWC', 'HWIO', 'NHWC'))
        total = total + jax.nn.silu(conv * s2 + b2 + x_nhwc)
    return jax.nn.silu(total * s3 + b3)


if __name__ == "__main__":
    key = jax.random.PRNGKey(0)
    N, C1, H, W = 2, 4, 16, 16          # RFEM(c1=4, c2=4, n=1, e=0.5, stride=1)
    C2 = C1
    C_ = int(C2 * 0.5)
    eps = 1e-5

    keys = jax.random.split(key, 6)

    # PyTorch-style NCHW input
    x_nchw = jax.random.normal(keys[0], (N, C1, H, W), dtype=jnp.float32)

    # kaiming_uniform_(nonlinearity='relu'): bound = sqrt(2) * sqrt(3 / fan_in)
    fan_in1 = C1 * 1 * 1
    bound1 = (2.0 ** 0.5) * (3.0 / fan_in1) ** 0.5
    w1_torch = jax.random.uniform(keys[1], (C_, C1, 1, 1),
                                  minval=-bound1, maxval=bound1, dtype=jnp.float32)
    fan_in2 = C_ * 3 * 3
    bound2 = (2.0 ** 0.5) * (3.0 / fan_in2) ** 0.5
    w2_torch = jax.random.uniform(keys[2], (C2, C_, 3, 3),
                                  minval=-bound2, maxval=bound2, dtype=jnp.float32)

    # Eval-mode BatchNorm affine params (randomized to exercise the scale folding;
    # fresh PyTorch init corresponds to scale=1, shift=0).
    def bn_affine(k, c):
        kg, kb, km, kv = jax.random.split(k, 4)
        gamma = jax.random.uniform(kg, (c,), minval=0.5, maxval=1.5, dtype=jnp.float32)
        beta = 0.1 * jax.random.normal(kb, (c,), dtype=jnp.float32)
        mean = 0.1 * jax.random.normal(km, (c,), dtype=jnp.float32)
        var = jax.random.uniform(kv, (c,), minval=0.5, maxval=1.5, dtype=jnp.float32)
        scale = gamma / jnp.sqrt(var + eps)
        return scale, beta - mean * scale

    s1, b1 = bn_affine(keys[3], C_)   # bn1
    s2, b2 = bn_affine(keys[4], C2)   # bn2
    s3, b3 = bn_affine(keys[5], C2)   # final RFEM bn

    out_nchw = rfem_pallas(x_nchw, w1_torch, w2_torch, s1, b1, s2, b2, s3, b3)
    out_nchw = jax.block_until_ready(out_nchw)

    x_nhwc = jnp.transpose(x_nchw, (0, 2, 3, 1))
    ref_nhwc = rfem_reference(x_nhwc, w1_torch, w2_torch, s1, b1, s2, b2, s3, b3)
    ref_nchw = jnp.transpose(ref_nhwc, (0, 3, 1, 2))
    ref_nchw = jax.block_until_ready(ref_nchw)

    assert out_nchw.shape == (N, C2, H, W)
    max_err = float(jnp.max(jnp.abs(out_nchw - ref_nchw)))
    assert max_err < 1e-3, max_err

    print("KERNEL_OK")
</pallas_src>

<mosaic_0001>
module attributes {stable_mosaic.version = 11 : i64} {
  func.func @_rfem_kernel(%arg0: i32, %arg1: memref<4x512xf32, #tpu.memory_space<vmem>>, %arg2: memref<1x512xi32, #tpu.memory_space<vmem>>, %arg3: memref<1x512xi32, #tpu.memory_space<vmem>>, %arg4: memref<4x2x1xf32, #tpu.memory_space<vmem>>, %arg5: memref<2x1xf32, #tpu.memory_space<vmem>>, %arg6: memref<9x2x4x1xf32, #tpu.memory_space<vmem>>, %arg7: memref<4x1xf32, #tpu.memory_space<vmem>>, %arg8: memref<4x1xf32, #tpu.memory_space<vmem>>, %arg9: memref<4x1xf32, #tpu.memory_space<vmem>>, %arg10: memref<4x512xf32, #tpu.memory_space<vmem>>) attributes {dimension_semantics = [#tpu.dimension_semantics<arbitrary>], iteration_bounds = array<i64: 1>, scalar_prefetch = 0 : i64, scratch_operands = 0 : i64, tpu.core_type = #tpu.core_type<tc>, window_params = [{pipeline_mode = #tpu.pipeline_mode<synchronous>, transform_indices = @transform_0, window_bounds = array<i64: 4, 512>}, {pipeline_mode = #tpu.pipeline_mode<synchronous>, transform_indices = @transform_1, window_bounds = array<i64: 1, 512>}, {pipeline_mode = #tpu.pipeline_mode<synchronous>, transform_indices = @transform_2, window_bounds = array<i64: 1, 512>}, {pipeline_mode = #tpu.pipeline_mode<synchronous>, transform_indices = @transform_3, window_bounds = array<i64: 4, 2, 1>}, {pipeline_mode = #tpu.pipeline_mode<synchronous>, transform_indices = @transform_4, window_bounds = array<i64: 2, 1>}, {pipeline_mode = #tpu.pipeline_mode<synchronous>, transform_indices = @transform_5, window_bounds = array<i64: 9, 2, 4, 1>}, {pipeline_mode = #tpu.pipeline_mode<synchronous>, transform_indices = @transform_6, window_bounds = array<i64: 4, 1>}, {pipeline_mode = #tpu.pipeline_mode<synchronous>, transform_indices = @transform_7, window_bounds = array<i64: 4, 1>}, {pipeline_mode = #tpu.pipeline_mode<synchronous>, transform_indices = @transform_8, window_bounds = array<i64: 4, 1>}, {pipeline_mode = #tpu.pipeline_mode<synchronous>, transform_indices = @transform_9, window_bounds = array<i64: 4, 512>}]} {
    %c0 = arith.constant 0 : index
    %c0_0 = arith.constant 0 : index
    %0 = vector.load %arg1[%c0, %c0_0] : memref<4x512xf32, #tpu.memory_space<vmem>>, vector<4x512xf32>
    %c0_1 = arith.constant 0 : index
    %c0_2 = arith.constant 0 : index
    %1 = vector.load %arg2[%c0_1, %c0_2] : memref<1x512xi32, #tpu.memory_space<vmem>>, vector<1x512xi32>
    %c0_3 = arith.constant 0 : index
    %c0_4 = arith.constant 0 : index
    %2 = vector.load %arg3[%c0_3, %c0_4] : memref<1x512xi32, #tpu.memory_space<vmem>>, vector<1x512xi32>
    %c0_5 = arith.constant 0 : index
    %c0_6 = arith.constant 0 : index
    %c0_7 = arith.constant 0 : index
    %3 = vector.load %arg4[%c0_5, %c0_6, %c0_7] : memref<4x2x1xf32, #tpu.memory_space<vmem>>, vector<4x2x1xf32>
    %c0_8 = arith.constant 0 : index
    %c0_9 = arith.constant 0 : index
    %c0_10 = arith.constant 0 : index
    %c0_11 = arith.constant 0 : index
    %4 = vector.load %arg6[%c0_8, %c0_9, %c0_10, %c0_11] : memref<9x2x4x1xf32, #tpu.memory_space<vmem>>, vector<9x2x4x1xf32>
    %c0_12 = arith.constant 0 : index
    %c0_13 = arith.constant 0 : index
    %5 = vector.load %arg5[%c0_12, %c0_13] : memref<2x1xf32, #tpu.memory_space<vmem>>, vector<2x1xf32>
    %c0_14 = arith.constant 0 : index
    %c0_15 = arith.constant 0 : index
    %6 = vector.load %arg7[%c0_14, %c0_15] : memref<4x1xf32, #tpu.memory_space<vmem>>, vector<4x1xf32>
    %cst = arith.constant 0.000000e+00 : f32
    %7 = vector.broadcast %cst : f32 to vector<2x512xf32>
    %8 = vector.extract_strided_slice %3 {offsets = [0, 0, 0], sizes = [1, 2, 1], strides = [1, 1, 1]} : vector<4x2x1xf32> to vector<1x2x1xf32>
    %9 = vector.shape_cast %8 : vector<1x2x1xf32> to vector<2x1xf32>
    %10 = vector.extract_strided_slice %0 {offsets = [0, 0], sizes = [1, 512], strides = [1, 1]} : vector<4x512xf32> to vector<1x512xf32>
    %11 = vector.broadcast %9 : vector<2x1xf32> to vector<2x512xf32>
    %12 = vector.broadcast %10 : vector<1x512xf32> to vector<2x512xf32>
    %13 = arith.mulf %11, %12 : vector<2x512xf32>
    %14 = arith.addf %7, %13 : vector<2x512xf32>
    %15 = vector.extract_strided_slice %3 {offsets = [1, 0, 0], sizes = [1, 2, 1], strides = [1, 1, 1]} : vector<4x2x1xf32> to vector<1x2x1xf32>
    %16 = vector.shape_cast %15 : vector<1x2x1xf32> to vector<2x1xf32>
    %17 = vector.extract_strided_slice %0 {offsets = [1, 0], sizes = [1, 512], strides = [1, 1]} : vector<4x512xf32> to vector<1x512xf32>
    %18 = vector.broadcast %16 : vector<2x1xf32> to vector<2x512xf32>
    %19 = vector.broadcast %17 : vector<1x512xf32> to vector<2x512xf32>
    %20 = arith.mulf %18, %19 : vector<2x512xf32>
    %21 = arith.addf %14, %20 : vector<2x512xf32>
    %22 = vector.extract_strided_slice %3 {offsets = [2, 0, 0], sizes = [1, 2, 1], strides = [1, 1, 1]} : vector<4x2x1xf32> to vector<1x2x1xf32>
    %23 = vector.shape_cast %22 : vector<1x2x1xf32> to vector<2x1xf32>
    %24 = vector.extract_strided_slice %0 {offsets = [2, 0], sizes = [1, 512], strides = [1, 1]} : vector<4x512xf32> to vector<1x512xf32>
    %25 = vector.broadcast %23 : vector<2x1xf32> to vector<2x512xf32>
    %26 = vector.broadcast %24 : vector<1x512xf32> to vector<2x512xf32>
    %27 = arith.mulf %25, %26 : vector<2x512xf32>
    %28 = arith.addf %21, %27 : vector<2x512xf32>
    %29 = vector.extract_strided_slice %3 {offsets = [3, 0, 0], sizes = [1, 2, 1], strides = [1, 1, 1]} : vector<4x2x1xf32> to vector<1x2x1xf32>
    %30 = vector.shape_cast %29 : vector<1x2x1xf32> to vector<2x1xf32>
    %31 = vector.extract_strided_slice %0 {offsets = [3, 0], sizes = [1, 512], strides = [1, 1]} : vector<4x512xf32> to vector<1x512xf32>
    %32 = vector.broadcast %30 : vector<2x1xf32> to vector<2x512xf32>
    %33 = vector.broadcast %31 : vector<1x512xf32> to vector<2x512xf32>
    %34 = arith.mulf %32, %33 : vector<2x512xf32>
    %35 = arith.addf %28, %34 : vector<2x512xf32>
    %36 = vector.broadcast %5 : vector<2x1xf32> to vector<2x512xf32>
    %37 = arith.addf %35, %36 : vector<2x512xf32>
    %38 = arith.negf %37 : vector<2x512xf32>
    %39 = math.exp %38 : vector<2x512xf32>
    %cst_16 = arith.constant 1.000000e+00 : f32
    %40 = vector.broadcast %cst_16 : f32 to vector<2x512xf32>
    %41 = arith.addf %40, %39 : vector<2x512xf32>
    %42 = arith.divf %40, %41 : vector<2x512xf32>
    %43 = arith.mulf %37, %42 : vector<2x512xf32>
    %c1_i32 = arith.constant 1 : i32
    %44 = vector.broadcast %c1_i32 : i32 to vector<1x512xi32>
    %45 = arith.subi %1, %44 : vector<1x512xi32>
    %c0_i32 = arith.constant 0 : i32
    %46 = vector.broadcast %c0_i32 : i32 to vector<1x512xi32>
    %47 = arith.cmpi sge, %45, %46 : vector<1x512xi32>
    %c1_i32_17 = arith.constant 1 : i32
    %48 = vector.broadcast %c1_i32_17 : i32 to vector<1x512xi32>
    %49 = arith.addi %1, %48 : vector<1x512xi32>
    %c16_i32 = arith.constant 16 : i32
    %50 = vector.broadcast %c16_i32 : i32 to vector<1x512xi32>
    %51 = arith.cmpi slt, %49, %50 : vector<1x512xi32>
    %c1_i32_18 = arith.constant 1 : i32
    %52 = vector.broadcast %c1_i32_18 : i32 to vector<1x512xi32>
    %53 = arith.subi %2, %52 : vector<1x512xi32>
    %c0_i32_19 = arith.constant 0 : i32
    %54 = vector.broadcast %c0_i32_19 : i32 to vector<1x512xi32>
    %55 = arith.cmpi sge, %53, %54 : vector<1x512xi32>
    %c1_i32_20 = arith.constant 1 : i32
    %56 = vector.broadcast %c1_i32_20 : i32 to vector<1x512xi32>
    %57 = arith.addi %2, %56 : vector<1x512xi32>
    %c16_i32_21 = arith.constant 16 : i32
    %58 = vector.broadcast %c16_i32_21 : i32 to vector<1x512xi32>
    %59 = arith.cmpi slt, %57, %58 : vector<1x512xi32>
    %c2_i32 = arith.constant 2 : i32
    %60 = vector.broadcast %c2_i32 : i32 to vector<1x512xi32>
    %61 = arith.subi %1, %60 : vector<1x512xi32>
    %c0_i32_22 = arith.constant 0 : i32
    %62 = vector.broadcast %c0_i32_22 : i32 to vector<1x512xi32>
    %63 = arith.cmpi sge, %61, %62 : vector<1x512xi32>
    %c2_i32_23 = arith.constant 2 : i32
    %64 = vector.broadcast %c2_i32_23 : i32 to vector<1x512xi32>
    %65 = arith.addi %1, %64 : vector<1x512xi32>
    %c16_i32_24 = arith.constant 16 : i32
    %66 = vector.broadcast %c16_i32_24 : i32 to vector<1x512xi32>
    %67 = arith.cmpi slt, %65, %66 : vector<1x512xi32>
    %c2_i32_25 = arith.constant 2 : i32
    %68 = vector.broadcast %c2_i32_25 : i32 to vector<1x512xi32>
    %69 = arith.subi %2, %68 : vector<1x512xi32>
    %c0_i32_26 = arith.constant 0 : i32
    %70 = vector.broadcast %c0_i32_26 : i32 to vector<1x512xi32>
    %71 = arith.cmpi sge, %69, %70 : vector<1x512xi32>
    %c2_i32_27 = arith.constant 2 : i32
    %72 = vector.broadcast %c2_i32_27 : i32 to vector<1x512xi32>
    %73 = arith.addi %2, %72 : vector<1x512xi32>
    %c16_i32_28 = arith.constant 16 : i32
    %74 = vector.broadcast %c16_i32_28 : i32 to vector<1x512xi32>
    %75 = arith.cmpi slt, %73, %74 : vector<1x512xi32>
    %c3_i32 = arith.constant 3 : i32
    %76 = vector.broadcast %c3_i32 : i32 to vector<1x512xi32>
    %77 = arith.subi %1, %76 : vector<1x512xi32>
    %c0_i32_29 = arith.constant 0 : i32
    %78 = vector.broadcast %c0_i32_29 : i32 to vector<1x512xi32>
    %79 = arith.cmpi sge, %77, %78 : vector<1x512xi32>
    %c3_i32_30 = arith.constant 3 : i32
    %80 = vector.broadcast %c3_i32_30 : i32 to vector<1x512xi32>
    %81 = arith.addi %1, %80 : vector<1x512xi32>
    %c16_i32_31 = arith.constant 16 : i32
    %82 = vector.broadcast %c16_i32_31 : i32 to vector<1x512xi32>
    %83 = arith.cmpi slt, %81, %82 : vector<1x512xi32>
    %c3_i32_32 = arith.constant 3 : i32
    %84 = vector.broadcast %c3_i32_32 : i32 to vector<1x512xi32>
    %85 = arith.subi %2, %84 : vector<1x512xi32>
    %c0_i32_33 = arith.constant 0 : i32
    %86 = vector.broadcast %c0_i32_33 : i32 to vector<1x512xi32>
    %87 = arith.cmpi sge, %85, %86 : vector<1x512xi32>
    %c3_i32_34 = arith.constant 3 : i32
    %88 = vector.broadcast %c3_i32_34 : i32 to vector<1x512xi32>
    %89 = arith.addi %2, %88 : vector<1x512xi32>
    %c16_i32_35 = arith.constant 16 : i32
    %90 = vector.broadcast %c16_i32_35 : i32 to vector<1x512xi32>
    %91 = arith.cmpi slt, %89, %90 : vector<1x512xi32>
    %cst_36 = arith.constant 0.000000e+00 : f32
    %92 = vector.broadcast %cst_36 : f32 to vector<4x512xf32>
    %93 = vector.extract_strided_slice %4 {offsets = [4, 0, 0, 0], sizes = [1, 1, 4, 1], strides = [1, 1, 1, 1]} : vector<9x2x4x1xf32> to vector<1x1x4x1xf32>
    %94 = vector.shape_cast %93 : vector<1x1x4x1xf32> to vector<4x1xf32>
    %95 = vector.extract_strided_slice %43 {offsets = [0, 0], sizes = [1, 512], strides = [1, 1]} : vector<2x512xf32> to vector<1x512xf32>
    %96 = vector.broadcast %94 : vector<4x1xf32> to vector<4x512xf32>
    %97 = vector.broadcast %95 : vector<1x512xf32> to vector<4x512xf32>
    %98 = arith.mulf %96, %97 : vector<4x512xf32>
    %99 = arith.addf %92, %98 : vector<4x512xf32>
    %100 = vector.extract_strided_slice %4 {offsets = [4, 1, 0, 0], sizes = [1, 1, 4, 1], strides = [1, 1, 1, 1]} : vector<9x2x4x1xf32> to vector<1x1x4x1xf32>
    %101 = vector.shape_cast %100 : vector<1x1x4x1xf32> to vector<4x1xf32>
    %102 = vector.extract_strided_slice %43 {offsets = [1, 0], sizes = [1, 512], strides = [1, 1]} : vector<2x512xf32> to vector<1x512xf32>
    %103 = vector.broadcast %101 : vector<4x1xf32> to vector<4x512xf32>
    %104 = vector.broadcast %102 : vector<1x512xf32> to vector<4x512xf32>
    %105 = arith.mulf %103, %104 : vector<4x512xf32>
    %106 = arith.addf %99, %105 : vector<4x512xf32>
    %107 = vector.broadcast %6 : vector<4x1xf32> to vector<4x512xf32>
    %108 = arith.addf %106, %107 : vector<4x512xf32>
    %109 = arith.addf %108, %0 : vector<4x512xf32>
    %cst_37 = arith.constant 0.000000e+00 : f32
    %110 = vector.broadcast %cst_37 : f32 to vector<4x512xf32>
    %c17_i32 = arith.constant 17 : i32
    %111 = tpu.dynamic_rotate %43 by %c17_i32 dim 1 : vector<2x512xf32>, i32 -> vector<2x512xf32>
    %112 = arith.andi %47, %55 : vector<1x512xi1>
    %cst_38 = arith.constant 0.000000e+00 : f32
    %113 = vector.shape_cast %112 : vector<1x512xi1> to vector<1x512xi1>
    %114 = vector.broadcast %113 : vector<1x512xi1> to vector<2x512xi1>
    %115 = vector.broadcast %cst_38 : f32 to vector<2x512xf32>
    %116 = arith.select %114, %111, %115 : vector<2x512xi1>, vector<2x512xf32>
    %117 = vector.extract_strided_slice %4 {offsets = [0, 0, 0, 0], sizes = [1, 1, 4, 1], strides = [1, 1, 1, 1]} : vector<9x2x4x1xf32> to vector<1x1x4x1xf32>
    %118 = vector.shape_cast %117 : vector<1x1x4x1xf32> to vector<4x1xf32>
    %119 = vector.extract_strided_slice %116 {offsets = [0, 0], sizes = [1, 512], strides = [1, 1]} : vector<2x512xf32> to vector<1x512xf32>
    %120 = vector.broadcast %118 : vector<4x1xf32> to vector<4x512xf32>
    %121 = vector.broadcast %119 : vector<1x512xf32> to vector<4x512xf32>
    %122 = arith.mulf %120, %121 : vector<4x512xf32>
    %123 = arith.addf %109, %122 : vector<4x512xf32>
    %124 = vector.extract_strided_slice %4 {offsets = [0, 1, 0, 0], sizes = [1, 1, 4, 1], strides = [1, 1, 1, 1]} : vector<9x2x4x1xf32> to vector<1x1x4x1xf32>
    %125 = vector.shape_cast %124 : vector<1x1x4x1xf32> to vector<4x1xf32>
    %126 = vector.extract_strided_slice %116 {offsets = [1, 0], sizes = [1, 512], strides = [1, 1]} : vector<2x512xf32> to vector<1x512xf32>
    %127 = vector.broadcast %125 : vector<4x1xf32> to vector<4x512xf32>
    %128 = vector.broadcast %126 : vector<1x512xf32> to vector<4x512xf32>
    %129 = arith.mulf %127, %128 : vector<4x512xf32>
    %130 = arith.addf %123, %129 : vector<4x512xf32>
    %c16_i32_39 = arith.constant 16 : i32
    %131 = tpu.dynamic_rotate %43 by %c16_i32_39 dim 1 : vector<2x512xf32>, i32 -> vector<2x512xf32>
    %cst_40 = arith.constant 0.000000e+00 : f32
    %132 = vector.shape_cast %47 : vector<1x512xi1> to vector<1x512xi1>
    %133 = vector.broadcast %132 : vector<1x512xi1> to vector<2x512xi1>
    %134 = vector.broadcast %cst_40 : f32 to vector<2x512xf32>
    %135 = arith.select %133, %131, %134 : vector<2x512xi1>, vector<2x512xf32>
    %136 = vector.extract_strided_slice %4 {offsets = [1, 0, 0, 0], sizes = [1, 1, 4, 1], strides = [1, 1, 1, 1]} : vector<9x2x4x1xf32> to vector<1x1x4x1xf32>
    %137 = vector.shape_cast %136 : vector<1x1x4x1xf32> to vector<4x1xf32>
    %138 = vector.extract_strided_slice %135 {offsets = [0, 0], sizes = [1, 512], strides = [1, 1]} : vector<2x512xf32> to vector<1x512xf32>
    %139 = vector.broadcast %137 : vector<4x1xf32> to vector<4x512xf32>
    %140 = vector.broadcast %138 : vector<1x512xf32> to vector<4x512xf32>
    %141 = arith.mulf %139, %140 : vector<4x512xf32>
    %142 = arith.addf %130, %141 : vector<4x512xf32>
    %143 = vector.extract_strided_slice %4 {offsets = [1, 1, 0, 0], sizes = [1, 1, 4, 1], strides = [1, 1, 1, 1]} : vector<9x2x4x1xf32> to vector<1x1x4x1xf32>
    %144 = vector.shape_cast %143 : vector<1x1x4x1xf32> to vector<4x1xf32>
    %145 = vector.extract_strided_slice %135 {offsets = [1, 0], sizes = [1, 512], strides = [1, 1]} : vector<2x512xf32> to vector<1x512xf32>
    %146 = vector.broadcast %144 : vector<4x1xf32> to vector<4x512xf32>
    %147 = vector.broadcast %145 : vector<1x512xf32> to vector<4x512xf32>
    %148 = arith.mulf %146, %147 : vector<4x512xf32>
    %149 = arith.addf %142, %148 : vector<4x512xf32>
    %c15_i32 = arith.constant 15 : i32
    %150 = tpu.dynamic_rotate %43 by %c15_i32 dim 1 : vector<2x512xf32>, i32 -> vector<2x512xf32>
    %151 = arith.andi %47, %59 : vector<1x512xi1>
    %cst_41 = arith.constant 0.000000e+00 : f32
    %152 = vector.shape_cast %151 : vector<1x512xi1> to vector<1x512xi1>
    %153 = vector.broadcast %152 : vector<1x512xi1> to vector<2x512xi1>
    %154 = vector.broadcast %cst_41 : f32 to vector<2x512xf32>
    %155 = arith.select %153, %150, %154 : vector<2x512xi1>, vector<2x512xf32>
    %156 = vector.extract_strided_slice %4 {offsets = [2, 0, 0, 0], sizes = [1, 1, 4, 1], strides = [1, 1, 1, 1]} : vector<9x2x4x1xf32> to vector<1x1x4x1xf32>
    %157 = vector.shape_cast %156 : vector<1x1x4x1xf32> to vector<4x1xf32>
    %158 = vector.extract_strided_slice %155 {offsets = [0, 0], sizes = [1, 512], strides = [1, 1]} : vector<2x512xf32> to vector<1x512xf32>
    %159 = vector.broadcast %157 : vector<4x1xf32> to vector<4x512xf32>
    %160 = vector.broadcast %158 : vector<1x512xf32> to vector<4x512xf32>
    %161 = arith.mulf %159, %160 : vector<4x512xf32>
    %162 = arith.addf %149, %161 : vector<4x512xf32>
    %163 = vector.extract_strided_slice %4 {offsets = [2, 1, 0, 0], sizes = [1, 1, 4, 1], strides = [1, 1, 1, 1]} : vector<9x2x4x1xf32> to vector<1x1x4x1xf32>
    %164 = vector.shape_cast %163 : vector<1x1x4x1xf32> to vector<4x1xf32>
    %165 = vector.extract_strided_slice %155 {offsets = [1, 0], sizes = [1, 512], strides = [1, 1]} : vector<2x512xf32> to vector<1x512xf32>
    %166 = vector.broadcast %164 : vector<4x1xf32> to vector<4x512xf32>
    %167 = vector.broadcast %165 : vector<1x512xf32> to vector<4x512xf32>
    %168 = arith.mulf %166, %167 : vector<4x512xf32>
    %169 = arith.addf %162, %168 : vector<4x512xf32>
    %c1_i32_42 = arith.constant 1 : i32
    %170 = tpu.dynamic_rotate %43 by %c1_i32_42 dim 1 : vector<2x512xf32>, i32 -> vector<2x512xf32>
    %cst_43 = arith.constant 0.000000e+00 : f32
    %171 = vector.shape_cast %55 : vector<1x512xi1> to vector<1x512xi1>
    %172 = vector.broadcast %171 : vector<1x512xi1> to vector<2x512xi1>
    %173 = vector.broadcast %cst_43 : f32 to vector<2x512xf32>
    %174 = arith.select %172, %170, %173 : vector<2x512xi1>, vector<2x512xf32>
    %175 = vector.extract_strided_slice %4 {offsets = [3, 0, 0, 0], sizes = [1, 1, 4, 1], strides = [1, 1, 1, 1]} : vector<9x2x4x1xf32> to vector<1x1x4x1xf32>
    %176 = vector.shape_cast %175 : vector<1x1x4x1xf32> to vector<4x1xf32>
    %177 = vector.extract_strided_slice %174 {offsets = [0, 0], sizes = [1, 512], strides = [1, 1]} : vector<2x512xf32> to vector<1x512xf32>
    %178 = vector.broadcast %176 : vector<4x1xf32> to vector<4x512xf32>
    %179 = vector.broadcast %177 : vector<1x512xf32> to vector<4x512xf32>
    %180 = arith.mulf %178, %179 : vector<4x512xf32>
    %181 = arith.addf %169, %180 : vector<4x512xf32>
    %182 = vector.extract_strided_slice %4 {offsets = [3, 1, 0, 0], sizes = [1, 1, 4, 1], strides = [1, 1, 1, 1]} : vector<9x2x4x1xf32> to vector<1x1x4x1xf32>
    %183 = vector.shape_cast %182 : vector<1x1x4x1xf32> to vector<4x1xf32>
    %184 = vector.extract_strided_slice %174 {offsets = [1, 0], sizes = [1, 512], strides = [1, 1]} : vector<2x512xf32> to vector<1x512xf32>
    %185 = vector.broadcast %183 : vector<4x1xf32> to vector<4x512xf32>
    %186 = vector.broadcast %184 : vector<1x512xf32> to vector<4x512xf32>
    %187 = arith.mulf %185, %186 : vector<4x512xf32>
    %188 = arith.addf %181, %187 : vector<4x512xf32>
    %c511_i32 = arith.constant 511 : i32
    %189 = tpu.dynamic_rotate %43 by %c511_i32 dim 1 : vector<2x512xf32>, i32 -> vector<2x512xf32>
    %cst_44 = arith.constant 0.000000e+00 : f32
    %190 = vector.shape_cast %59 : vector<1x512xi1> to vector<1x512xi1>
    %191 = vector.broadcast %190 : vector<1x512xi1> to vector<2x512xi1>
    %192 = vector.broadcast %cst_44 : f32 to vector<2x512xf32>
    %193 = arith.select %191, %189, %192 : vector<2x512xi1>, vector<2x512xf32>
    %194 = vector.extract_strided_slice %4 {offsets = [5, 0, 0, 0], sizes = [1, 1, 4, 1], strides = [1, 1, 1, 1]} : vector<9x2x4x1xf32> to vector<1x1x4x1xf32>
    %195 = vector.shape_cast %194 : vector<1x1x4x1xf32> to vector<4x1xf32>
    %196 = vector.extract_strided_slice %193 {offsets = [0, 0], sizes = [1, 512], strides = [1, 1]} : vector<2x512xf32> to vector<1x512xf32>
    %197 = vector.broadcast %195 : vector<4x1xf32> to vector<4x512xf32>
    %198 = vector.broadcast %196 : vector<1x512xf32> to vector<4x512xf32>
    %199 = arith.mulf %197, %198 : vector<4x512xf32>
    %200 = arith.addf %188, %199 : vector<4x512xf32>
    %201 = vector.extract_strided_slice %4 {offsets = [5, 1, 0, 0], sizes = [1, 1, 4, 1], strides = [1, 1, 1, 1]} : vector<9x2x4x1xf32> to vector<1x1x4x1xf32>
    %202 = vector.shape_cast %201 : vector<1x1x4x1xf32> to vector<4x1xf32>
    %203 = vector.extract_strided_slice %193 {offsets = [1, 0], sizes = [1, 512], strides = [1, 1]} : vector<2x512xf32> to vector<1x512xf32>
    %204 = vector.broadcast %202 : vector<4x1xf32> to vector<4x512xf32>
    %205 = vector.broadcast %203 : vector<1x512xf32> to vector<4x512xf32>
    %206 = arith.mulf %204, %205 : vector<4x512xf32>
    %207 = arith.addf %200, %206 : vector<4x512xf32>
    %c497_i32 = arith.constant 497 : i32
    %208 = tpu.dynamic_rotate %43 by %c497_i32 dim 1 : vector<2x512xf32>, i32 -> vector<2x512xf32>
    %209 = arith.andi %51, %55 : vector<1x512xi1>
    %cst_45 = arith.constant 0.000000e+00 : f32
    %210 = vector.shape_cast %209 : vector<1x512xi1> to vector<1x512xi1>
    %211 = vector.broadcast %210 : vector<1x512xi1> to vector<2x512xi1>
    %212 = vector.broadcast %cst_45 : f32 to vector<2x512xf32>
    %213 = arith.select %211, %208, %212 : vector<2x512xi1>, vector<2x512xf32>
    %214 = vector.extract_strided_slice %4 {offsets = [6, 0, 0, 0], sizes = [1, 1, 4, 1], strides = [1, 1, 1, 1]} : vector<9x2x4x1xf32> to vector<1x1x4x1xf32>
    %215 = vector.shape_cast %214 : vector<1x1x4x1xf32> to vector<4x1xf32>
    %216 = vector.extract_strided_slice %213 {offsets = [0, 0], sizes = [1, 512], strides = [1, 1]} : vector<2x512xf32> to vector<1x512xf32>
    %217 = vector.broadcast %215 : vector<4x1xf32> to vector<4x512xf32>
    %218 = vector.broadcast %216 : vector<1x512xf32> to vector<4x512xf32>
    %219 = arith.mulf %217, %218 : vector<4x512xf32>
    %220 = arith.addf %207, %219 : vector<4x512xf32>
    %221 = vector.extract_strided_slice %4 {offsets = [6, 1, 0, 0], sizes = [1, 1, 4, 1], strides = [1, 1, 1, 1]} : vector<9x2x4x1xf32> to vector<1x1x4x1xf32>
    %222 = vector.shape_cast %221 : vector<1x1x4x1xf32> to vector<4x1xf32>
    %223 = vector.extract_strided_slice %213 {offsets = [1, 0], sizes = [1, 512], strides = [1, 1]} : vector<2x512xf32> to vector<1x512xf32>
    %224 = vector.broadcast %222 : vector<4x1xf32> to vector<4x512xf32>
    %225 = vector.broadcast %223 : vector<1x512xf32> to vector<4x512xf32>
    %226 = arith.mulf %224, %225 : vector<4x512xf32>
    %227 = arith.addf %220, %226 : vector<4x512xf32>
    %c496_i32 = arith.constant 496 : i32
    %228 = tpu.dynamic_rotate %43 by %c496_i32 dim 1 : vector<2x512xf32>, i32 -> vector<2x512xf32>
    %cst_46 = arith.constant 0.000000e+00 : f32
    %229 = vector.shape_cast %51 : vector<1x512xi1> to vector<1x512xi1>
    %230 = vector.broadcast %229 : vector<1x512xi1> to vector<2x512xi1>
    %231 = vector.broadcast %cst_46 : f32 to vector<2x512xf32>
    %232 = arith.select %230, %228, %231 : vector<2x512xi1>, vector<2x512xf32>
    %233 = vector.extract_strided_slice %4 {offsets = [7, 0, 0, 0], sizes = [1, 1, 4, 1], strides = [1, 1, 1, 1]} : vector<9x2x4x1xf32> to vector<1x1x4x1xf32>
    %234 = vector.shape_cast %233 : vector<1x1x4x1xf32> to vector<4x1xf32>
    %235 = vector.extract_strided_slice %232 {offsets = [0, 0], sizes = [1, 512], strides = [1, 1]} : vector<2x512xf32> to vector<1x512xf32>
    %236 = vector.broadcast %234 : vector<4x1xf32> to vector<4x512xf32>
    %237 = vector.broadcast %235 : vector<1x512xf32> to vector<4x512xf32>
    %238 = arith.mulf %236, %237 : vector<4x512xf32>
    %239 = arith.addf %227, %238 : vector<4x512xf32>
    %240 = vector.extract_strided_slice %4 {offsets = [7, 1, 0, 0], sizes = [1, 1, 4, 1], strides = [1, 1, 1, 1]} : vector<9x2x4x1xf32> to vector<1x1x4x1xf32>
    %241 = vector.shape_cast %240 : vector<1x1x4x1xf32> to vector<4x1xf32>
    %242 = vector.extract_strided_slice %232 {offsets = [1, 0], sizes = [1, 512], strides = [1, 1]} : vector<2x512xf32> to vector<1x512xf32>
    %243 = vector.broadcast %241 : vector<4x1xf32> to vector<4x512xf32>
    %244 = vector.broadcast %242 : vector<1x512xf32> to vector<4x512xf32>
    %245 = arith.mulf %243, %244 : vector<4x512xf32>
    %246 = arith.addf %239, %245 : vector<4x512xf32>
    %c495_i32 = arith.constant 495 : i32
    %247 = tpu.dynamic_rotate %43 by %c495_i32 dim 1 : vector<2x512xf32>, i32 -> vector<2x512xf32>
    %248 = arith.andi %51, %59 : vector<1x512xi1>
    %cst_47 = arith.constant 0.000000e+00 : f32
    %249 = vector.shape_cast %248 : vector<1x512xi1> to vector<1x512xi1>
    %250 = vector.broadcast %249 : vector<1x512xi1> to vector<2x512xi1>
    %251 = vector.broadcast %cst_47 : f32 to vector<2x512xf32>
    %252 = arith.select %250, %247, %251 : vector<2x512xi1>, vector<2x512xf32>
    %253 = vector.extract_strided_slice %4 {offsets = [8, 0, 0, 0], sizes = [1, 1, 4, 1], strides = [1, 1, 1, 1]} : vector<9x2x4x1xf32> to vector<1x1x4x1xf32>
    %254 = vector.shape_cast %253 : vector<1x1x4x1xf32> to vector<4x1xf32>
    %255 = vector.extract_strided_slice %252 {offsets = [0, 0], sizes = [1, 512], strides = [1, 1]} : vector<2x512xf32> to vector<1x512xf32>
    %256 = vector.broadcast %254 : vector<4x1xf32> to vector<4x512xf32>
    %257 = vector.broadcast %255 : vector<1x512xf32> to vector<4x512xf32>
    %258 = arith.mulf %256, %257 : vector<4x512xf32>
    %259 = arith.addf %246, %258 : vector<4x512xf32>
    %260 = vector.extract_strided_slice %4 {offsets = [8, 1, 0, 0], sizes = [1, 1, 4, 1], strides = [1, 1, 1, 1]} : vector<9x2x4x1xf32> to vector<1x1x4x1xf32>
    %261 = vector.shape_cast %260 : vector<1x1x4x1xf32> to vector<4x1xf32>
    %262 = vector.extract_strided_slice %252 {offsets = [1, 0], sizes = [1, 512], strides = [1, 1]} : vector<2x512xf32> to vector<1x512xf32>
    %263 = vector.broadcast %261 : vector<4x1xf32> to vector<4x512xf32>
    %264 = vector.broadcast %262 : vector<1x512xf32> to vector<4x512xf32>
    %265 = arith.mulf %263, %264 : vector<4x512xf32>
    %266 = arith.addf %259, %265 : vector<4x512xf32>
    %267 = arith.negf %266 : vector<4x512xf32>
    %268 = math.exp %267 : vector<4x512xf32>
    %cst_48 = arith.constant 1.000000e+00 : f32
    %269 = vector.broadcast %cst_48 : f32 to vector<4x512xf32>
    %270 = arith.addf %269, %268 : vector<4x512xf32>
    %271 = arith.divf %269, %270 : vector<4x512xf32>
    %272 = arith.mulf %266, %271 : vector<4x512xf32>
    %273 = arith.addf %110, %272 : vector<4x512xf32>
    %c34_i32 = arith.constant 34 : i32
    %274 = tpu.dynamic_rotate %43 by %c34_i32 dim 1 : vector<2x512xf32>, i32 -> vector<2x512xf32>
    %275 = arith.andi %63, %71 : vector<1x512xi1>
    %cst_49 = arith.constant 0.000000e+00 : f32
    %276 = vector.shape_cast %275 : vector<1x512xi1> to vector<1x512xi1>
    %277 = vector.broadcast %276 : vector<1x512xi1> to vector<2x512xi1>
    %278 = vector.broadcast %cst_49 : f32 to vector<2x512xf32>
    %279 = arith.select %277, %274, %278 : vector<2x512xi1>, vector<2x512xf32>
    %280 = vector.extract_strided_slice %4 {offsets = [0, 0, 0, 0], sizes = [1, 1, 4, 1], strides = [1, 1, 1, 1]} : vector<9x2x4x1xf32> to vector<1x1x4x1xf32>
    %281 = vector.shape_cast %280 : vector<1x1x4x1xf32> to vector<4x1xf32>
    %282 = vector.extract_strided_slice %279 {offsets = [0, 0], sizes = [1, 512], strides = [1, 1]} : vector<2x512xf32> to vector<1x512xf32>
    %283 = vector.broadcast %281 : vector<4x1xf32> to vector<4x512xf32>
    %284 = vector.broadcast %282 : vector<1x512xf32> to vector<4x512xf32>
    %285 = arith.mulf %283, %284 : vector<4x512xf32>
    %286 = arith.addf %109, %285 : vector<4x512xf32>
    %287 = vector.extract_strided_slice %4 {offsets = [0, 1, 0, 0], sizes = [1, 1, 4, 1], strides = [1, 1, 1, 1]} : vector<9x2x4x1xf32> to vector<1x1x4x1xf32>
    %288 = vector.shape_cast %287 : vector<1x1x4x1xf32> to vector<4x1xf32>
    %289 = vector.extract_strided_slice %279 {offsets = [1, 0], sizes = [1, 512], strides = [1, 1]} : vector<2x512xf32> to vector<1x512xf32>
    %290 = vector.broadcast %288 : vector<4x1xf32> to vector<4x512xf32>
    %291 = vector.broadcast %289 : vector<1x512xf32> to vector<4x512xf32>
    %292 = arith.mulf %290, %291 : vector<4x512xf32>
    %293 = arith.addf %286, %292 : vector<4x512xf32>
    %c32_i32 = arith.constant 32 : i32
    %294 = tpu.dynamic_rotate %43 by %c32_i32 dim 1 : vector<2x512xf32>, i32 -> vector<2x512xf32>
    %cst_50 = arith.constant 0.000000e+00 : f32
    %295 = vector.shape_cast %63 : vector<1x512xi1> to vector<1x512xi1>
    %296 = vector.broadcast %295 : vector<1x512xi1> to vector<2x512xi1>
    %297 = vector.broadcast %cst_50 : f32 to vector<2x512xf32>
    %298 = arith.select %296, %294, %297 : vector<2x512xi1>, vector<2x512xf32>
    %299 = vector.extract_strided_slice %4 {offsets = [1, 0, 0, 0], sizes = [1, 1, 4, 1], strides = [1, 1, 1, 1]} : vector<9x2x4x1xf32> to vector<1x1x4x1xf32>
    %300 = vector.shape_cast %299 : vector<1x1x4x1xf32> to vector<4x1xf32>
    %301 = vector.extract_strided_slice %298 {offsets = [0, 0], sizes = [1, 512], strides = [1, 1]} : vector<2x512xf32> to vector<1x512xf32>
    %302 = vector.broadcast %300 : vector<4x1xf32> to vector<4x512xf32>
    %303 = vector.broadcast %301 : vector<1x512xf32> to vector<4x512xf32>
    %304 = arith.mulf %302, %303 : vector<4x512xf32>
    %305 = arith.addf %293, %304 : vector<4x512xf32>
    %306 = vector.extract_strided_slice %4 {offsets = [1, 1, 0, 0], sizes = [1, 1, 4, 1], strides = [1, 1, 1, 1]} : vector<9x2x4x1xf32> to vector<1x1x4x1xf32>
    %307 = vector.shape_cast %306 : vector<1x1x4x1xf32> to vector<4x1xf32>
    %308 = vector.extract_strided_slice %298 {offsets = [1, 0], sizes = [1, 512], strides = [1, 1]} : vector<2x512xf32> to vector<1x512xf32>
    %309 = vector.broadcast %307 : vector<4x1xf32> to vector<4x512xf32>
    %310 = vector.broadcast %308 : vector<1x512xf32> to vector<4x512xf32>
    %311 = arith.mulf %309, %310 : vector<4x512xf32>
    %312 = arith.addf %305, %311 : vector<4x512xf32>
    %c30_i32 = arith.constant 30 : i32
    %313 = tpu.dynamic_rotate %43 by %c30_i32 dim 1 : vector<2x512xf32>, i32 -> vector<2x512xf32>
    %314 = arith.andi %63, %75 : vector<1x512xi1>
    %cst_51 = arith.constant 0.000000e+00 : f32
    %315 = vector.shape_cast %314 : vector<1x512xi1> to vector<1x512xi1>
    %316 = vector.broadcast %315 : vector<1x512xi1> to vector<2x512xi1>
    %317 = vector.broadcast %cst_51 : f32 to vector<2x512xf32>
    %318 = arith.select %316, %313, %317 : vector<2x512xi1>, vector<2x512xf32>
    %319 = vector.extract_strided_slice %4 {offsets = [2, 0, 0, 0], sizes = [1, 1, 4, 1], strides = [1, 1, 1, 1]} : vector<9x2x4x1xf32> to vector<1x1x4x1xf32>
    %320 = vector.shape_cast %319 : vector<1x1x4x1xf32> to vector<4x1xf32>
    %321 = vector.extract_strided_slice %318 {offsets = [0, 0], sizes = [1, 512], strides = [1, 1]} : vector<2x512xf32> to vector<1x512xf32>
    %322 = vector.broadcast %320 : vector<4x1xf32> to vector<4x512xf32>
    %323 = vector.broadcast %321 : vector<1x512xf32> to vector<4x512xf32>
    %324 = arith.mulf %322, %323 : vector<4x512xf32>
    %325 = arith.addf %312, %324 : vector<4x512xf32>
    %326 = vector.extract_strided_slice %4 {offsets = [2, 1, 0, 0], sizes = [1, 1, 4, 1], strides = [1, 1, 1, 1]} : vector<9x2x4x1xf32> to vector<1x1x4x1xf32>
    %327 = vector.shape_cast %326 : vector<1x1x4x1xf32> to vector<4x1xf32>
    %328 = vector.extract_strided_slice %318 {offsets = [1, 0], sizes = [1, 512], strides = [1, 1]} : vector<2x512xf32> to vector<1x512xf32>
    %329 = vector.broadcast %327 : vector<4x1xf32> to vector<4x512xf32>
    %330 = vector.broadcast %328 : vector<1x512xf32> to vector<4x512xf32>
    %331 = arith.mulf %329, %330 : vector<4x512xf32>
    %332 = arith.addf %325, %331 : vector<4x512xf32>
    %c2_i32_52 = arith.constant 2 : i32
    %333 = tpu.dynamic_rotate %43 by %c2_i32_52 dim 1 : vector<2x512xf32>, i32 -> vector<2x512xf32>
    %cst_53 = arith.constant 0.000000e+00 : f32
    %334 = vector.shape_cast %71 : vector<1x512xi1> to vector<1x512xi1>
    %335 = vector.broadcast %334 : vector<1x512xi1> to vector<2x512xi1>
    %336 = vector.broadcast %cst_53 : f32 to vector<2x512xf32>
    %337 = arith.select %335, %333, %336 : vector<2x512xi1>, vector<2x512xf32>
    %338 = vector.extract_strided_slice %4 {offsets = [3, 0, 0, 0], sizes = [1, 1, 4, 1], strides = [1, 1, 1, 1]} : vector<9x2x4x1xf32> to vector<1x1x4x1xf32>
    %339 = vector.shape_cast %338 : vector<1x1x4x1xf32> to vector<4x1xf32>
    %340 = vector.extract_strided_slice %337 {offsets = [0, 0], sizes = [1, 512], strides = [1, 1]} : vector<2x512xf32> to vector<1x512xf32>
    %341 = vector.broadcast %339 : vector<4x1xf32> to vector<4x512xf32>
    %342 = vector.broadcast %340 : vector<1x512xf32> to vector<4x512xf32>
    %343 = arith.mulf %341, %342 : vector<4x512xf32>
    %344 = arith.addf %332, %343 : vector<4x512xf32>
    %345 = vector.extract_strided_slice %4 {offsets = [3, 1, 0, 0], sizes = [1, 1, 4, 1], strides = [1, 1, 1, 1]} : vector<9x2x4x1xf32> to vector<1x1x4x1xf32>
    %346 = vector.shape_cast %345 : vector<1x1x4x1xf32> to vector<4x1xf32>
    %347 = vector.extract_strided_slice %337 {offsets = [1, 0], sizes = [1, 512], strides = [1, 1]} : vector<2x512xf32> to vector<1x512xf32>
    %348 = vector.broadcast %346 : vector<4x1xf32> to vector<4x512xf32>
    %349 = vector.broadcast %347 : vector<1x512xf32> to vector<4x512xf32>
    %350 = arith.mulf %348, %349 : vector<4x512xf32>
    %351 = arith.addf %344, %350 : vector<4x512xf32>
    %c510_i32 = arith.constant 510 : i32
    %352 = tpu.dynamic_rotate %43 by %c510_i32 dim 1 : vector<2x512xf32>, i32 -> vector<2x512xf32>
    %cst_54 = arith.constant 0.000000e+00 : f32
    %353 = vector.shape_cast %75 : vector<1x512xi1> to vector<1x512xi1>
    %354 = vector.broadcast %353 : vector<1x512xi1> to vector<2x512xi1>
    %355 = vector.broadcast %cst_54 : f32 to vector<2x512xf32>
    %356 = arith.select %354, %352, %355 : vector<2x512xi1>, vector<2x512xf32>
    %357 = vector.extract_strided_slice %4 {offsets = [5, 0, 0, 0], sizes = [1, 1, 4, 1], strides = [1, 1, 1, 1]} : vector<9x2x4x1xf32> to vector<1x1x4x1xf32>
    %358 = vector.shape_cast %357 : vector<1x1x4x1xf32> to vector<4x1xf32>
    %359 = vector.extract_strided_slice %356 {offsets = [0, 0], sizes = [1, 512], strides = [1, 1]} : vector<2x512xf32> to vector<1x512xf32>
    %360 = vector.broadcast %358 : vector<4x1xf32> to vector<4x512xf32>
    %361 = vector.broadcast %359 : vector<1x512xf32> to vector<4x512xf32>
    %362 = arith.mulf %360, %361 : vector<4x512xf32>
    %363 = arith.addf %351, %362 : vector<4x512xf32>
    %364 = vector.extract_strided_slice %4 {offsets = [5, 1, 0, 0], sizes = [1, 1, 4, 1], strides = [1, 1, 1, 1]} : vector<9x2x4x1xf32> to vector<1x1x4x1xf32>
    %365 = vector.shape_cast %364 : vector<1x1x4x1xf32> to vector<4x1xf32>
    %366 = vector.extract_strided_slice %356 {offsets = [1, 0], sizes = [1, 512], strides = [1, 1]} : vector<2x512xf32> to vector<1x512xf32>
    %367 = vector.broadcast %365 : vector<4x1xf32> to vector<4x512xf32>
    %368 = vector.broadcast %366 : vector<1x512xf32> to vector<4x512xf32>
    %369 = arith.mulf %367, %368 : vector<4x512xf32>
    %370 = arith.addf %363, %369 : vector<4x512xf32>
    %c482_i32 = arith.constant 482 : i32
    %371 = tpu.dynamic_rotate %43 by %c482_i32 dim 1 : vector<2x512xf32>, i32 -> vector<2x512xf32>
    %372 = arith.andi %67, %71 : vector<1x512xi1>
    %cst_55 = arith.constant 0.000000e+00 : f32
    %373 = vector.shape_cast %372 : vector<1x512xi1> to vector<1x512xi1>
    %374 = vector.broadcast %373 : vector<1x512xi1> to vector<2x512xi1>
    %375 = vector.broadcast %cst_55 : f32 to vector<2x512xf32>
    %376 = arith.select %374, %371, %375 : vector<2x512xi1>, vector<2x512xf32>
    %377 = vector.extract_strided_slice %4 {offsets = [6, 0, 0, 0], sizes = [1, 1, 4, 1], strides = [1, 1, 1, 1]} : vector<9x2x4x1xf32> to vector<1x1x4x1xf32>
    %378 = vector.shape_cast %377 : vector<1x1x4x1xf32> to vector<4x1xf32>
    %379 = vector.extract_strided_slice %376 {offsets = [0, 0], sizes = [1, 512], strides = [1, 1]} : vector<2x512xf32> to vector<1x512xf32>
    %380 = vector.broadcast %378 : vector<4x1xf32> to vector<4x512xf32>
    %381 = vector.broadcast %379 : vector<1x512xf32> to vector<4x512xf32>
    %382 = arith.mulf %380, %381 : vector<4x512xf32>
    %383 = arith.addf %370, %382 : vector<4x512xf32>
    %384 = vector.extract_strided_slice %4 {offsets = [6, 1, 0, 0], sizes = [1, 1, 4, 1], strides = [1, 1, 1, 1]} : vector<9x2x4x1xf32> to vector<1x1x4x1xf32>
    %385 = vector.shape_cast %384 : vector<1x1x4x1xf32> to vector<4x1xf32>
    %386 = vector.extract_strided_slice %376 {offsets = [1, 0], sizes = [1, 512], strides = [1, 1]} : vector<2x512xf32> to vector<1x512xf32>
    %387 = vector.broadcast %385 : vector<4x1xf32> to vector<4x512xf32>
    %388 = vector.broadcast %386 : vector<1x512xf32> to vector<4x512xf32>
    %389 = arith.mulf %387, %388 : vector<4x512xf32>
    %390 = arith.addf %383, %389 : vector<4x512xf32>
    %c480_i32 = arith.constant 480 : i32
    %391 = tpu.dynamic_rotate %43 by %c480_i32 dim 1 : vector<2x512xf32>, i32 -> vector<2x512xf32>
    %cst_56 = arith.constant 0.000000e+00 : f32
    %392 = vector.shape_cast %67 : vector<1x512xi1> to vector<1x512xi1>
    %393 = vector.broadcast %392 : vector<1x512xi1> to vector<2x512xi1>
    %394 = vector.broadcast %cst_56 : f32 to vector<2x512xf32>
    %395 = arith.select %393, %391, %394 : vector<2x512xi1>, vector<2x512xf32>
    %396 = vector.extract_strided_slice %4 {offsets = [7, 0, 0, 0], sizes = [1, 1, 4, 1], strides = [1, 1, 1, 1]} : vector<9x2x4x1xf32> to vector<1x1x4x1xf32>
    %397 = vector.shape_cast %396 : vector<1x1x4x1xf32> to vector<4x1xf32>
    %398 = vector.extract_strided_slice %395 {offsets = [0, 0], sizes = [1, 512], strides = [1, 1]} : vector<2x512xf32> to vector<1x512xf32>
    %399 = vector.broadcast %397 : vector<4x1xf32> to vector<4x512xf32>
    %400 = vector.broadcast %398 : vector<1x512xf32> to vector<4x512xf32>
    %401 = arith.mulf %399, %400 : vector<4x512xf32>
    %402 = arith.addf %390, %401 : vector<4x512xf32>
    %403 = vector.extract_strided_slice %4 {offsets = [7, 1, 0, 0], sizes = [1, 1, 4, 1], strides = [1, 1, 1, 1]} : vector<9x2x4x1xf32> to vector<1x1x4x1xf32>
    %404 = vector.shape_cast %403 : vector<1x1x4x1xf32> to vector<4x1xf32>
    %405 = vector.extract_strided_slice %395 {offsets = [1, 0], sizes = [1, 512], strides = [1, 1]} : vector<2x512xf32> to vector<1x512xf32>
    %406 = vector.broadcast %404 : vector<4x1xf32> to vector<4x512xf32>
    %407 = vector.broadcast %405 : vector<1x512xf32> to vector<4x512xf32>
    %408 = arith.mulf %406, %407 : vector<4x512xf32>
    %409 = arith.addf %402, %408 : vector<4x512xf32>
    %c478_i32 = arith.constant 478 : i32
    %410 = tpu.dynamic_rotate %43 by %c478_i32 dim 1 : vector<2x512xf32>, i32 -> vector<2x512xf32>
    %411 = arith.andi %67, %75 : vector<1x512xi1>
    %cst_57 = arith.constant 0.000000e+00 : f32
    %412 = vector.shape_cast %411 : vector<1x512xi1> to vector<1x512xi1>
    %413 = vector.broadcast %412 : vector<1x512xi1> to vector<2x512xi1>
    %414 = vector.broadcast %cst_57 : f32 to vector<2x512xf32>
    %415 = arith.select %413, %410, %414 : vector<2x512xi1>, vector<2x512xf32>
    %416 = vector.extract_strided_slice %4 {offsets = [8, 0, 0, 0], sizes = [1, 1, 4, 1], strides = [1, 1, 1, 1]} : vector<9x2x4x1xf32> to vector<1x1x4x1xf32>
    %417 = vector.shape_cast %416 : vector<1x1x4x1xf32> to vector<4x1xf32>
    %418 = vector.extract_strided_slice %415 {offsets = [0, 0], sizes = [1, 512], strides = [1, 1]} : vector<2x512xf32> to vector<1x512xf32>
    %419 = vector.broadcast %417 : vector<4x1xf32> to vector<4x512xf32>
    %420 = vector.broadcast %418 : vector<1x512xf32> to vector<4x512xf32>
    %421 = arith.mulf %419, %420 : vector<4x512xf32>
    %422 = arith.addf %409, %421 : vector<4x512xf32>
    %423 = vector.extract_strided_slice %4 {offsets = [8, 1, 0, 0], sizes = [1, 1, 4, 1], strides = [1, 1, 1, 1]} : vector<9x2x4x1xf32> to vector<1x1x4x1xf32>
    %424 = vector.shape_cast %423 : vector<1x1x4x1xf32> to vector<4x1xf32>
    %425 = vector.extract_strided_slice %415 {offsets = [1, 0], sizes = [1, 512], strides = [1, 1]} : vector<2x512xf32> to vector<1x512xf32>
    %426 = vector.broadcast %424 : vector<4x1xf32> to vector<4x512xf32>
    %427 = vector.broadcast %425 : vector<1x512xf32> to vector<4x512xf32>
    %428 = arith.mulf %426, %427 : vector<4x512xf32>
    %429 = arith.addf %422, %428 : vector<4x512xf32>
    %430 = arith.negf %429 : vector<4x512xf32>
    %431 = math.exp %430 : vector<4x512xf32>
    %cst_58 = arith.constant 1.000000e+00 : f32
    %432 = vector.broadcast %cst_58 : f32 to vector<4x512xf32>
    %433 = arith.addf %432, %431 : vector<4x512xf32>
    %434 = arith.divf %432, %433 : vector<4x512xf32>
    %435 = arith.mulf %429, %434 : vector<4x512xf32>
    %436 = arith.addf %273, %435 : vector<4x512xf32>
    %c51_i32 = arith.constant 51 : i32
    %437 = tpu.dynamic_rotate %43 by %c51_i32 dim 1 : vector<2x512xf32>, i32 -> vector<2x512xf32>
    %438 = arith.andi %79, %87 : vector<1x512xi1>
    %cst_59 = arith.constant 0.000000e+00 : f32
    %439 = vector.shape_cast %438 : vector<1x512xi1> to vector<1x512xi1>
    %440 = vector.broadcast %439 : vector<1x512xi1> to vector<2x512xi1>
    %441 = vector.broadcast %cst_59 : f32 to vector<2x512xf32>
    %442 = arith.select %440, %437, %441 : vector<2x512xi1>, vector<2x512xf32>
    %443 = vector.extract_strided_slice %4 {offsets = [0, 0, 0, 0], sizes = [1, 1, 4, 1], strides = [1, 1, 1, 1]} : vector<9x2x4x1xf32> to vector<1x1x4x1xf32>
    %444 = vector.shape_cast %443 : vector<1x1x4x1xf32> to vector<4x1xf32>
    %445 = vector.extract_strided_slice %442 {offsets = [0, 0], sizes = [1, 512], strides = [1, 1]} : vector<2x512xf32> to vector<1x512xf32>
    %446 = vector.broadcast %444 : vector<4x1xf32> to vector<4x512xf32>
    %447 = vector.broadcast %445 : vector<1x512xf32> to vector<4x512xf32>
    %448 = arith.mulf %446, %447 : vector<4x512xf32>
    %449 = arith.addf %109, %448 : vector<4x512xf32>
    %450 = vector.extract_strided_slice %4 {offsets = [0, 1, 0, 0], sizes = [1, 1, 4, 1], strides = [1, 1, 1, 1]} : vector<9x2x4x1xf32> to vector<1x1x4x1xf32>
    %451 = vector.shape_cast %450 : vector<1x1x4x1xf32> to vector<4x1xf32>
    %452 = vector.extract_strided_slice %442 {offsets = [1, 0], sizes = [1, 512], strides = [1, 1]} : vector<2x512xf32> to vector<1x512xf32>
    %453 = vector.broadcast %451 : vector<4x1xf32> to vector<4x512xf32>
    %454 = vector.broadcast %452 : vector<1x512xf32> to vector<4x512xf32>
    %455 = arith.mulf %453, %454 : vector<4x512xf32>
    %456 = arith.addf %449, %455 : vector<4x512xf32>
    %c48_i32 = arith.constant 48 : i32
    %457 = tpu.dynamic_rotate %43 by %c48_i32 dim 1 : vector<2x512xf32>, i32 -> vector<2x512xf32>
    %cst_60 = arith.constant 0.000000e+00 : f32
    %458 = vector.shape_cast %79 : vector<1x512xi1> to vector<1x512xi1>
    %459 = vector.broadcast %458 : vector<1x512xi1> to vector<2x512xi1>
    %460 = vector.broadcast %cst_60 : f32 to vector<2x512xf32>
    %461 = arith.select %459, %457, %460 : vector<2x512xi1>, vector<2x512xf32>
    %462 = vector.extract_strided_slice %4 {offsets = [1, 0, 0, 0], sizes = [1, 1, 4, 1], strides = [1, 1, 1, 1]} : vector<9x2x4x1xf32> to vector<1x1x4x1xf32>
    %463 = vector.shape_cast %462 : vector<1x1x4x1xf32> to vector<4x1xf32>
    %464 = vector.extract_strided_slice %461 {offsets = [0, 0], sizes = [1, 512], strides = [1, 1]} : vector<2x512xf32> to vector<1x512xf32>
    %465 = vector.broadcast %463 : vector<4x1xf32> to vector<4x512xf32>
    %466 = vector.broadcast %464 : vector<1x512xf32> to vector<4x512xf32>
    %467 = arith.mulf %465, %466 : vector<4x512xf32>
    %468 = arith.addf %456, %467 : vector<4x512xf32>
    %469 = vector.extract_strided_slice %4 {offsets = [1, 1, 0, 0], sizes = [1, 1, 4, 1], strides = [1, 1, 1, 1]} : vector<9x2x4x1xf32> to vector<1x1x4x1xf32>
    %470 = vector.shape_cast %469 : vector<1x1x4x1xf32> to vector<4x1xf32>
    %471 = vector.extract_strided_slice %461 {offsets = [1, 0], sizes = [1, 512], strides = [1, 1]} : vector<2x512xf32> to vector<1x512xf32>
    %472 = vector.broadcast %470 : vector<4x1xf32> to vector<4x512xf32>
    %473 = vector.broadcast %471 : vector<1x512xf32> to vector<4x512xf32>
    %474 = arith.mulf %472, %473 : vector<4x512xf32>
    %475 = arith.addf %468, %474 : vector<4x512xf32>
    %c45_i32 = arith.constant 45 : i32
    %476 = tpu.dynamic_rotate %43 by %c45_i32 dim 1 : vector<2x512xf32>, i32 -> vector<2x512xf32>
    %477 = arith.andi %79, %91 : vector<1x512xi1>
    %cst_61 = arith.constant 0.000000e+00 : f32
    %478 = vector.shape_cast %477 : vector<1x512xi1> to vector<1x512xi1>
    %479 = vector.broadcast %478 : vector<1x512xi1> to vector<2x512xi1>
    %480 = vector.broadcast %cst_61 : f32 to vector<2x512xf32>
    %481 = arith.select %479, %476, %480 : vector<2x512xi1>, vector<2x512xf32>
    %482 = vector.extract_strided_slice %4 {offsets = [2, 0, 0, 0], sizes = [1, 1, 4, 1], strides = [1, 1, 1, 1]} : vector<9x2x4x1xf32> to vector<1x1x4x1xf32>
    %483 = vector.shape_cast %482 : vector<1x1x4x1xf32> to vector<4x1xf32>
    %484 = vector.extract_strided_slice %481 {offsets = [0, 0], sizes = [1, 512], strides = [1, 1]} : vector<2x512xf32> to vector<1x512xf32>
    %485 = vector.broadcast %483 : vector<4x1xf32> to vector<4x512xf32>
    %486 = vector.broadcast %484 : vector<1x512xf32> to vector<4x512xf32>
    %487 = arith.mulf %485, %486 : vector<4x512xf32>
    %488 = arith.addf %475, %487 : vector<4x512xf32>
    %489 = vector.extract_strided_slice %4 {offsets = [2, 1, 0, 0], sizes = [1, 1, 4, 1], strides = [1, 1, 1, 1]} : vector<9x2x4x1xf32> to vector<1x1x4x1xf32>
    %490 = vector.shape_cast %489 : vector<1x1x4x1xf32> to vector<4x1xf32>
    %491 = vector.extract_strided_slice %481 {offsets = [1, 0], sizes = [1, 512], strides = [1, 1]} : vector<2x512xf32> to vector<1x512xf32>
    %492 = vector.broadcast %490 : vector<4x1xf32> to vector<4x512xf32>
    %493 = vector.broadcast %491 : vector<1x512xf32> to vector<4x512xf32>
    %494 = arith.mulf %492, %493 : vector<4x512xf32>
    %495 = arith.addf %488, %494 : vector<4x512xf32>
    %c3_i32_62 = arith.constant 3 : i32
    %496 = tpu.dynamic_rotate %43 by %c3_i32_62 dim 1 : vector<2x512xf32>, i32 -> vector<2x512xf32>
    %cst_63 = arith.constant 0.000000e+00 : f32
    %497 = vector.shape_cast %87 : vector<1x512xi1> to vector<1x512xi1>
    %498 = vector.broadcast %497 : vector<1x512xi1> to vector<2x512xi1>
    %499 = vector.broadcast %cst_63 : f32 to vector<2x512xf32>
    %500 = arith.select %498, %496, %499 : vector<2x512xi1>, vector<2x512xf32>
    %501 = vector.extract_strided_slice %4 {offsets = [3, 0, 0, 0], sizes = [1, 1, 4, 1], strides = [1, 1, 1, 1]} : vector<9x2x4x1xf32> to vector<1x1x4x1xf32>
    %502 = vector.shape_cast %501 : vector<1x1x4x1xf32> to vector<4x1xf32>
    %503 = vector.extract_strided_slice %500 {offsets = [0, 0], sizes = [1, 512], strides = [1, 1]} : vector<2x512xf32> to vector<1x512xf32>
    %504 = vector.broadcast %502 : vector<4x1xf32> to vector<4x512xf32>
    %505 = vector.broadcast %503 : vector<1x512xf32> to vector<4x512xf32>
    %506 = arith.mulf %504, %505 : vector<4x512xf32>
    %507 = arith.addf %495, %506 : vector<4x512xf32>
    %508 = vector.extract_strided_slice %4 {offsets = [3, 1, 0, 0], sizes = [1, 1, 4, 1], strides = [1, 1, 1, 1]} : vector<9x2x4x1xf32> to vector<1x1x4x1xf32>
    %509 = vector.shape_cast %508 : vector<1x1x4x1xf32> to vector<4x1xf32>
    %510 = vector.extract_strided_slice %500 {offsets = [1, 0], sizes = [1, 512], strides = [1, 1]} : vector<2x512xf32> to vector<1x512xf32>
    %511 = vector.broadcast %509 : vector<4x1xf32> to vector<4x512xf32>
    %512 = vector.broadcast %510 : vector<1x512xf32> to vector<4x512xf32>
    %513 = arith.mulf %511, %512 : vector<4x512xf32>
    %514 = arith.addf %507, %513 : vector<4x512xf32>
    %c509_i32 = arith.constant 509 : i32
    %515 = tpu.dynamic_rotate %43 by %c509_i32 dim 1 : vector<2x512xf32>, i32 -> vector<2x512xf32>
    %cst_64 = arith.constant 0.000000e+00 : f32
    %516 = vector.shape_cast %91 : vector<1x512xi1> to vector<1x512xi1>
    %517 = vector.broadcast %516 : vector<1x512xi1> to vector<2x512xi1>
    %518 = vector.broadcast %cst_64 : f32 to vector<2x512xf32>
    %519 = arith.select %517, %515, %518 : vector<2x512xi1>, vector<2x512xf32>
    %520 = vector.extract_strided_slice %4 {offsets = [5, 0, 0, 0], sizes = [1, 1, 4, 1], strides = [1, 1, 1, 1]} : vector<9x2x4x1xf32> to vector<1x1x4x1xf32>
    %521 = vector.shape_cast %520 : vector<1x1x4x1xf32> to vector<4x1xf32>
    %522 = vector.extract_strided_slice %519 {offsets = [0, 0], sizes = [1, 512], strides = [1, 1]} : vector<2x512xf32> to vector<1x512xf32>
    %523 = vector.broadcast %521 : vector<4x1xf32> to vector<4x512xf32>
    %524 = vector.broadcast %522 : vector<1x512xf32> to vector<4x512xf32>
    %525 = arith.mulf %523, %524 : vector<4x512xf32>
    %526 = arith.addf %514, %525 : vector<4x512xf32>
    %527 = vector.extract_strided_slice %4 {offsets = [5, 1, 0, 0], sizes = [1, 1, 4, 1], strides = [1, 1, 1, 1]} : vector<9x2x4x1xf32> to vector<1x1x4x1xf32>
    %528 = vector.shape_cast %527 : vector<1x1x4x1xf32> to vector<4x1xf32>
    %529 = vector.extract_strided_slice %519 {offsets = [1, 0], sizes = [1, 512], strides = [1, 1]} : vector<2x512xf32> to vector<1x512xf32>
    %530 = vector.broadcast %528 : vector<4x1xf32> to vector<4x512xf32>
    %531 = vector.broadcast %529 : vector<1x512xf32> to vector<4x512xf32>
    %532 = arith.mulf %530, %531 : vector<4x512xf32>
    %533 = arith.addf %526, %532 : vector<4x512xf32>
    %c467_i32 = arith.constant 467 : i32
    %534 = tpu.dynamic_rotate %43 by %c467_i32 dim 1 : vector<2x512xf32>, i32 -> vector<2x512xf32>
    %535 = arith.andi %83, %87 : vector<1x512xi1>
    %cst_65 = arith.constant 0.000000e+00 : f32
    %536 = vector.shape_cast %535 : vector<1x512xi1> to vector<1x512xi1>
    %537 = vector.broadcast %536 : vector<1x512xi1> to vector<2x512xi1>
    %538 = vector.broadcast %cst_65 : f32 to vector<2x512xf32>
    %539 = arith.select %537, %534, %538 : vector<2x512xi1>, vector<2x512xf32>
    %540 = vector.extract_strided_slice %4 {offsets = [6, 0, 0, 0], sizes = [1, 1, 4, 1], strides = [1, 1, 1, 1]} : vector<9x2x4x1xf32> to vector<1x1x4x1xf32>
    %541 = vector.shape_cast %540 : vector<1x1x4x1xf32> to vector<4x1xf32>
    %542 = vector.extract_strided_slice %539 {offsets = [0, 0], sizes = [1, 512], strides = [1, 1]} : vector<2x512xf32> to vector<1x512xf32>
    %543 = vector.broadcast %541 : vector<4x1xf32> to vector<4x512xf32>
    %544 = vector.broadcast %542 : vector<1x512xf32> to vector<4x512xf32>
    %545 = arith.mulf %543, %544 : vector<4x512xf32>
    %546 = arith.addf %533, %545 : vector<4x512xf32>
    %547 = vector.extract_strided_slice %4 {offsets = [6, 1, 0, 0], sizes = [1, 1, 4, 1], strides = [1, 1, 1, 1]} : vector<9x2x4x1xf32> to vector<1x1x4x1xf32>
    %548 = vector.shape_cast %547 : vector<1x1x4x1xf32> to vector<4x1xf32>
    %549 = vector.extract_strided_slice %539 {offsets = [1, 0], sizes = [1, 512], strides = [1, 1]} : vector<2x512xf32> to vector<1x512xf32>
    %550 = vector.broadcast %548 : vector<4x1xf32> to vector<4x512xf32>
    %551 = vector.broadcast %549 : vector<1x512xf32> to vector<4x512xf32>
    %552 = arith.mulf %550, %551 : vector<4x512xf32>
    %553 = arith.addf %546, %552 : vector<4x512xf32>
    %c464_i32 = arith.constant 464 : i32
    %554 = tpu.dynamic_rotate %43 by %c464_i32 dim 1 : vector<2x512xf32>, i32 -> vector<2x512xf32>
    %cst_66 = arith.constant 0.000000e+00 : f32
    %555 = vector.shape_cast %83 : vector<1x512xi1> to vector<1x512xi1>
    %556 = vector.broadcast %555 : vector<1x512xi1> to vector<2x512xi1>
    %557 = vector.broadcast %cst_66 : f32 to vector<2x512xf32>
    %558 = arith.select %556, %554, %557 : vector<2x512xi1>, vector<2x512xf32>
    %559 = vector.extract_strided_slice %4 {offsets = [7, 0, 0, 0], sizes = [1, 1, 4, 1], strides = [1, 1, 1, 1]} : vector<9x2x4x1xf32> to vector<1x1x4x1xf32>
    %560 = vector.shape_cast %559 : vector<1x1x4x1xf32> to vector<4x1xf32>
    %561 = vector.extract_strided_slice %558 {offsets = [0, 0], sizes = [1, 512], strides = [1, 1]} : vector<2x512xf32> to vector<1x512xf32>
    %562 = vector.broadcast %560 : vector<4x1xf32> to vector<4x512xf32>
    %563 = vector.broadcast %561 : vector<1x512xf32> to vector<4x512xf32>
    %564 = arith.mulf %562, %563 : vector<4x512xf32>
    %565 = arith.addf %553, %564 : vector<4x512xf32>
    %566 = vector.extract_strided_slice %4 {offsets = [7, 1, 0, 0], sizes = [1, 1, 4, 1], strides = [1, 1, 1, 1]} : vector<9x2x4x1xf32> to vector<1x1x4x1xf32>
    %567 = vector.shape_cast %566 : vector<1x1x4x1xf32> to vector<4x1xf32>
    %568 = vector.extract_strided_slice %558 {offsets = [1, 0], sizes = [1, 512], strides = [1, 1]} : vector<2x512xf32> to vector<1x512xf32>
    %569 = vector.broadcast %567 : vector<4x1xf32> to vector<4x512xf32>
    %570 = vector.broadcast %568 : vector<1x512xf32> to vector<4x512xf32>
    %571 = arith.mulf %569, %570 : vector<4x512xf32>
    %572 = arith.addf %565, %571 : vector<4x512xf32>
    %c461_i32 = arith.constant 461 : i32
    %573 = tpu.dynamic_rotate %43 by %c461_i32 dim 1 : vector<2x512xf32>, i32 -> vector<2x512xf32>
    %574 = arith.andi %83, %91 : vector<1x512xi1>
    %cst_67 = arith.constant 0.000000e+00 : f32
    %575 = vector.shape_cast %574 : vector<1x512xi1> to vector<1x512xi1>
    %576 = vector.broadcast %575 : vector<1x512xi1> to vector<2x512xi1>
    %577 = vector.broadcast %cst_67 : f32 to vector<2x512xf32>
    %578 = arith.select %576, %573, %577 : vector<2x512xi1>, vector<2x512xf32>
    %579 = vector.extract_strided_slice %4 {offsets = [8, 0, 0, 0], sizes = [1, 1, 4, 1], strides = [1, 1, 1, 1]} : vector<9x2x4x1xf32> to vector<1x1x4x1xf32>
    %580 = vector.shape_cast %579 : vector<1x1x4x1xf32> to vector<4x1xf32>
    %581 = vector.extract_strided_slice %578 {offsets = [0, 0], sizes = [1, 512], strides = [1, 1]} : vector<2x512xf32> to vector<1x512xf32>
    %582 = vector.broadcast %580 : vector<4x1xf32> to vector<4x512xf32>
    %583 = vector.broadcast %581 : vector<1x512xf32> to vector<4x512xf32>
    %584 = arith.mulf %582, %583 : vector<4x512xf32>
    %585 = arith.addf %572, %584 : vector<4x512xf32>
    %586 = vector.extract_strided_slice %4 {offsets = [8, 1, 0, 0], sizes = [1, 1, 4, 1], strides = [1, 1, 1, 1]} : vector<9x2x4x1xf32> to vector<1x1x4x1xf32>
    %587 = vector.shape_cast %586 : vector<1x1x4x1xf32> to vector<4x1xf32>
    %588 = vector.extract_strided_slice %578 {offsets = [1, 0], sizes = [1, 512], strides = [1, 1]} : vector<2x512xf32> to vector<1x512xf32>
    %589 = vector.broadcast %587 : vector<4x1xf32> to vector<4x512xf32>
    %590 = vector.broadcast %588 : vector<1x512xf32> to vector<4x512xf32>
    %591 = arith.mulf %589, %590 : vector<4x512xf32>
    %592 = arith.addf %585, %591 : vector<4x512xf32>
    %593 = arith.negf %592 : vector<4x512xf32>
    %594 = math.exp %593 : vector<4x512xf32>
    %cst_68 = arith.constant 1.000000e+00 : f32
    %595 = vector.broadcast %cst_68 : f32 to vector<4x512xf32>
    %596 = arith.addf %595, %594 : vector<4x512xf32>
    %597 = arith.divf %595, %596 : vector<4x512xf32>
    %598 = arith.mulf %592, %597 : vector<4x512xf32>
    %599 = arith.addf %436, %598 : vector<4x512xf32>
    %600 = arith.addf %599, %0 : vector<4x512xf32>
    %c0_69 = arith.constant 0 : index
    %c0_70 = arith.constant 0 : index
    %601 = vector.load %arg8[%c0_69, %c0_70] : memref<4x1xf32, #tpu.memory_space<vmem>>, vector<4x1xf32>
    %602 = vector.broadcast %601 : vector<4x1xf32> to vector<4x512xf32>
    %603 = arith.mulf %600, %602 : vector<4x512xf32>
    %c0_71 = arith.constant 0 : index
    %c0_72 = arith.constant 0 : index
    %604 = vector.load %arg9[%c0_71, %c0_72] : memref<4x1xf32, #tpu.memory_space<vmem>>, vector<4x1xf32>
    %605 = vector.broadcast %604 : vector<4x1xf32> to vector<4x512xf32>
    %606 = arith.addf %603, %605 : vector<4x512xf32>
    %607 = arith.negf %606 : vector<4x512xf32>
    %608 = math.exp %607 : vector<4x512xf32>
    %cst_73 = arith.constant 1.000000e+00 : f32
    %609 = vector.broadcast %cst_73 : f32 to vector<4x512xf32>
    %610 = arith.addf %609, %608 : vector<4x512xf32>
    %611 = arith.divf %609, %610 : vector<4x512xf32>
    %612 = arith.mulf %606, %611 : vector<4x512xf32>
    %c0_74 = arith.constant 0 : index
    %c0_75 = arith.constant 0 : index
    %613 = vector.load %arg10[%c0_74, %c0_75] : memref<4x512xf32, #tpu.memory_space<vmem>>, vector<4x512xf32>
    tpu.vector_store %arg10[%c0_74, %c0_75], %612 {strides = array<i32>} : memref<4x512xf32, #tpu.memory_space<vmem>>, vector<4x512xf32>,
    return
  }
  func.func @transform_0(%arg0: i32) -> (i32, i32) {
    %c0_i32 = arith.constant 0 : i32
    %c0_i32_0 = arith.constant 0 : i32
    %c0_i32_1 = arith.constant 0 : i32
    return %c0_i32, %c0_i32_0 : i32, i32
  }
  func.func @transform_1(%arg0: i32) -> (i32, i32) {
    %c0_i32 = arith.constant 0 : i32
    %c0_i32_0 = arith.constant 0 : i32
    %c0_i32_1 = arith.constant 0 : i32
    return %c0_i32, %c0_i32_0 : i32, i32
  }
  func.func @transform_2(%arg0: i32) -> (i32, i32) {
    %c0_i32 = arith.constant 0 : i32
    %c0_i32_0 = arith.constant 0 : i32
    %c0_i32_1 = arith.constant 0 : i32
    return %c0_i32, %c0_i32_0 : i32, i32
  }
  func.func @transform_3(%arg0: i32) -> (i32, i32, i32) {
    %c0_i32 = arith.constant 0 : i32
    %c0_i32_0 = arith.constant 0 : i32
    %c0_i32_1 = arith.constant 0 : i32
    %c0_i32_2 = arith.constant 0 : i32
    return %c0_i32, %c0_i32_0, %c0_i32_1 : i32, i32, i32
  }
  func.func @transform_4(%arg0: i32) -> (i32, i32) {
    %c0_i32 = arith.constant 0 : i32
    %c0_i32_0 = arith.constant 0 : i32
    %c0_i32_1 = arith.constant 0 : i32
    return %c0_i32, %c0_i32_0 : i32, i32
  }
  func.func @transform_5(%arg0: i32) -> (i32, i32, i32, i32) {
    %c0_i32 = arith.constant 0 : i32
    %c0_i32_0 = arith.constant 0 : i32
    %c0_i32_1 = arith.constant 0 : i32
    %c0_i32_2 = arith.constant 0 : i32
    %c0_i32_3 = arith.constant 0 : i32
    return %c0_i32, %c0_i32_0, %c0_i32_1, %c0_i32_2 : i32, i32, i32, i32
  }
  func.func @transform_6(%arg0: i32) -> (i32, i32) {
    %c0_i32 = arith.constant 0 : i32
    %c0_i32_0 = arith.constant 0 : i32
    %c0_i32_1 = arith.constant 0 : i32
    return %c0_i32, %c0_i32_0 : i32, i32
  }
  func.func @transform_7(%arg0: i32) -> (i32, i32) {
    %c0_i32 = arith.constant 0 : i32
    %c0_i32_0 = arith.constant 0 : i32
    %c0_i32_1 = arith.constant 0 : i32
    return %c0_i32, %c0_i32_0 : i32, i32
  }
  func.func @transform_8(%arg0: i32) -> (i32, i32) {
    %c0_i32 = arith.constant 0 : i32
    %c0_i32_0 = arith.constant 0 : i32
    %c0_i32_1 = arith.constant 0 : i32
    return %c0_i32, %c0_i32_0 : i32, i32
  }
  func.func @transform_9(%arg0: i32) -> (i32, i32) {
    %c0_i32 = arith.constant 0 : i32
    %c0_i32_0 = arith.constant 0 : i32
    %c0_i32_1 = arith.constant 0 : i32
    return %c0_i32, %c0_i32_0 : i32, i32
  }
}

</mosaic_0001>

<llo_original>
// kernel: rfem_pallas.1
$region0: #{rfem_pallas.1}
  #allocation0 [shape = 'u32[]', space=smem, size = 0x4, offset = 0x4, fixed_abs, tag = 'smem constant byte address 0x4 - core index']
  #allocation1 [shape = 'u32[72,128]{1,0:T(1,128)}', space=vmem, size = 0x9000, scoped, tag = 'internal scratch']
  %s0 = inlined_call_operand.vmem [shape: f32[4,512], index: 0, kind: input, shape index: {}]
  %s1 = inlined_call_operand.vmem [shape: s32[1,512], index: 1, kind: input, shape index: {}]
  %s2 = inlined_call_operand.vmem [shape: s32[1,512], index: 2, kind: input, shape index: {}]
  %s3 = inlined_call_operand.vmem [shape: f32[4,2,1], index: 3, kind: input, shape index: {}]
  %s4 = inlined_call_operand.vmem [shape: f32[2,1], index: 4, kind: input, shape index: {}]
  %s5 = inlined_call_operand.vmem [shape: f32[9,2,4,1], index: 5, kind: input, shape index: {}]
  %s6 = inlined_call_operand.vmem [shape: f32[4,1], index: 6, kind: input, shape index: {}]
  %s7 = inlined_call_operand.vmem [shape: f32[4,1], index: 7, kind: input, shape index: {}]
  %s8 = inlined_call_operand.vmem [shape: f32[4,1], index: 8, kind: input, shape index: {}]
  %s9 = inlined_call_operand.vmem [shape: f32[4,512], index: 9, kind: output, shape index: {}]
  %s10 = sld [smem:[#allocation0]]
  $region46: #{rfem_pallas.1} parent=0
    _
  %s12 = ssub.s32 1, %s10
  %s13 = scalar_select 0, %s12, %s10
  // Predicated region
  $region2: #{rfem_pallas.1} parent=0 // pred_check
    _
  $region3: #{rfem_pallas.1} parent=0 // pred_check_branch
    %15 = sbr.rel (0) target = $region5
  $region4: #{rfem_pallas.1} parent=0 // pred_region
    _
  $region5: #{rfem_pallas.1} parent=0 // pred_fallthru
    _
  // Predicated region
  $region6: #{rfem_pallas.1} parent=0 // pred_check
    _
  $region7: #{rfem_pallas.1} parent=0 // pred_check_branch
    %17 = sbr.rel (0) target = $region9
  $region8: #{rfem_pallas.1} parent=0 // pred_region
    _
  $region9: #{rfem_pallas.1} parent=0 // pred_fallthru
    _
  // Predicated region
  $region10: #{rfem_pallas.1} parent=0 // pred_check
    _
  $region11: #{rfem_pallas.1} parent=0 // pred_check_branch
    %19 = sbr.rel (0) target = $region13
  $region12: #{rfem_pallas.1} parent=0 // pred_region
    _
  $region13: #{rfem_pallas.1} parent=0 // pred_fallthru
    _
  // Predicated region
  $region14: #{rfem_pallas.1} parent=0 // pred_check
    _
  $region15: #{rfem_pallas.1} parent=0 // pred_check_branch
    %21 = sbr.rel (0) target = $region17
  $region16: #{rfem_pallas.1} parent=0 // pred_region
    _
  $region17: #{rfem_pallas.1} parent=0 // pred_fallthru
    _
  // Predicated region
  $region18: #{rfem_pallas.1} parent=0 // pred_check
    _
  $region19: #{rfem_pallas.1} parent=0 // pred_check_branch
    %23 = sbr.rel (0) target = $region21
  $region20: #{rfem_pallas.1} parent=0 // pred_region
    _
  $region21: #{rfem_pallas.1} parent=0 // pred_fallthru
    _
  // Predicated region
  $region22: #{rfem_pallas.1} parent=0 // pred_check
    _
  $region23: #{rfem_pallas.1} parent=0 // pred_check_branch
    %25 = sbr.rel (0) target = $region25
  $region24: #{rfem_pallas.1} parent=0 // pred_region
    _
  $region25: #{rfem_pallas.1} parent=0 // pred_fallthru
    _
  // Predicated region
  $region26: #{rfem_pallas.1} parent=0 // pred_check
    _
  $region27: #{rfem_pallas.1} parent=0 // pred_check_branch
    %27 = sbr.rel (0) target = $region29
  $region28: #{rfem_pallas.1} parent=0 // pred_region
    _
  $region29: #{rfem_pallas.1} parent=0 // pred_fallthru
    _
  // Predicated region
  $region30: #{rfem_pallas.1} parent=0 // pred_check
    _
  $region31: #{rfem_pallas.1} parent=0 // pred_check_branch
    %29 = sbr.rel (0) target = $region33
  $region32: #{rfem_pallas.1} parent=0 // pred_region
    _
  $region33: #{rfem_pallas.1} parent=0 // pred_fallthru
    _
  // Predicated region
  $region34: #{rfem_pallas.1} parent=0 // pred_check
    _
  $region35: #{rfem_pallas.1} parent=0 // pred_check_branch
    %31 = sbr.rel (0) target = $region37
  $region36: #{rfem_pallas.1} parent=0 // pred_region
    _
  $region37: #{rfem_pallas.1} parent=0 // pred_fallthru
    _
  %v32 = vld [vmem:[%s0] sm:$0xff]
  %v33 = vld [vmem:[%s0 + $0x8] sm:$0xff]
  %v34 = vld [vmem:[%s1] sm:$0xf]
  %v35 = vld [vmem:[%s2] sm:$0xf]
  %v36 = vld [vmem:[%s3] sm:$0x3]
  %v37 = vld [vmem:[%s3 + $0x2] sm:$0x3]
  %v38 = vld [vmem:[%s3 + $0x4] sm:$0x3]
  %v39 = vld [vmem:[%s3 + $0x6] sm:$0x3]
  %v40 = vld [vmem:[%s5] sm:$0xf]
  %v41 = vld [vmem:[%s5 + $0x4] sm:$0xf]
  %v42 = vld [vmem:[%s5 + $0x8] sm:$0xf]
  %v43 = vld [vmem:[%s5 + $0xc] sm:$0xf]
  %v44 = vld [vmem:[%s5 + $0x10] sm:$0xf]
  %v45 = vld [vmem:[%s5 + $0x14] sm:$0xf]
  %v46 = vld [vmem:[%s5 + $0x18] sm:$0xf]
  %v47 = vld [vmem:[%s5 + $0x1c] sm:$0xf]
  %v48 = vld [vmem:[%s5 + $0x20] sm:$0xf]
  %v49 = vld [vmem:[%s5 + $0x24] sm:$0xf]
  %v50 = vld [vmem:[%s5 + $0x28] sm:$0xf]
  %v51 = vld [vmem:[%s5 + $0x2c] sm:$0xf]
  %v52 = vld [vmem:[%s5 + $0x30] sm:$0xf]
  %v53 = vld [vmem:[%s5 + $0x34] sm:$0xf]
  %v54 = vld [vmem:[%s5 + $0x38] sm:$0xf]
  %v55 = vld [vmem:[%s5 + $0x3c] sm:$0xf]
  %v56 = vld [vmem:[%s5 + $0x40] sm:$0xf]
  %v57 = vld [vmem:[%s5 + $0x44] sm:$0xf]
  %v58 = vld [vmem:[%s4] sm:$0x3]
  %v59 = vld [vmem:[%s6] sm:$0xf]
  %61 = vset.pattern.permute.xlu0 0
  %62 = vperm.xlu0 %61, %v36
  %v63 = vpop.permute.xlu0 %62
  %v67 = vperm.slane %v32, 0
  %v68 = vperm.slane %v32, 4
  %v69 = vperm.slane %v33, 0
  %v70 = vperm.slane %v33, 4
  %v75 = vperm.slane %v67, 0
  %v76 = vperm.slane %v68, 0
  %v77 = vperm.slane %v69, 0
  %v78 = vperm.slane %v70, 0
  %v79 = vmul.f32 %v63, %v75
  %v80 = vmul.f32 %v63, %v76
  %v81 = vmul.f32 %v63, %v77
  %v82 = vmul.f32 %v63, %v78
  %v83 = vadd.f32 %v79, 0.0
  %v84 = vadd.f32 %v80, 0.0
  %v85 = vadd.f32 %v81, 0.0
  %v86 = vadd.f32 %v82, 0.0
  %88 = vset.pattern.permute.xlu0 0
  %89 = vperm.xlu0 %88, %v37
  %v90 = vpop.permute.xlu0 %89
  %v92 = vperm.slane %v32, 1
  %v93 = vperm.slane %v32, 5
  %v94 = vperm.slane %v33, 1
  %v95 = vperm.slane %v33, 5
  %v100 = vperm.slane %v92, 1
  %v101 = vperm.slane %v93, 1
  %v102 = vperm.slane %v94, 1
  %v103 = vperm.slane %v95, 1
  %v104 = vmul.f32 %v90, %v100
  %v105 = vmul.f32 %v90, %v101
  %v106 = vmul.f32 %v90, %v102
  %v107 = vmul.f32 %v90, %v103
  %v108 = vadd.f32 %v83, %v104
  %v109 = vadd.f32 %v84, %v105
  %v110 = vadd.f32 %v85, %v106
  %v111 = vadd.f32 %v86, %v107
  %113 = vset.pattern.permute.xlu0 0
  %114 = vperm.xlu0 %113, %v38
  %v115 = vpop.permute.xlu0 %114
  %v117 = vperm.slane %v32, 2
  %v118 = vperm.slane %v32, 6
  %v119 = vperm.slane %v33, 2
  %v120 = vperm.slane %v33, 6
  %v125 = vperm.slane %v117, 2
  %v126 = vperm.slane %v118, 2
  %v127 = vperm.slane %v119, 2
  %v128 = vperm.slane %v120, 2
  %v129 = vmul.f32 %v115, %v125
  %v130 = vmul.f32 %v115, %v126
  %v131 = vmul.f32 %v115, %v127
  %v132 = vmul.f32 %v115, %v128
  %v133 = vadd.f32 %v108, %v129
  %v134 = vadd.f32 %v109, %v130
  %v135 = vadd.f32 %v110, %v131
  %v136 = vadd.f32 %v111, %v132
  %138 = vset.pattern.permute.xlu0 0
  %139 = vperm.xlu0 %138, %v39
  %v140 = vpop.permute.xlu0 %139
  %v142 = vperm.slane %v32, 3
  %v143 = vperm.slane %v32, 7
  %v144 = vperm.slane %v33, 3
  %v145 = vperm.slane %v33, 7
  %v150 = vperm.slane %v142, 3
  %v151 = vperm.slane %v143, 3
  %v152 = vperm.slane %v144, 3
  %v153 = vperm.slane %v145, 3
  %v154 = vmul.f32 %v140, %v150
  %v155 = vmul.f32 %v140, %v151
  %v156 = vmul.f32 %v140, %v152
  %v157 = vmul.f32 %v140, %v153
  %v158 = vadd.f32 %v133, %v154
  %v159 = vadd.f32 %v134, %v155
  %v160 = vadd.f32 %v135, %v156
  %v161 = vadd.f32 %v136, %v157
  %163 = vset.pattern.permute.xlu0 0
  %164 = vperm.xlu0 %163, %v58
  %v165 = vpop.permute.xlu0 %164
  %v167 = vadd.f32 %v158, %v165
  %v168 = vadd.f32 %v159, %v165
  %v169 = vadd.f32 %v160, %v165
  %v170 = vadd.f32 %v161, %v165
  %v171 = vxor.u32 %v167, 2147483648
  %v172 = vxor.u32 %v168, 2147483648
  %v173 = vxor.u32 %v169, 2147483648
  %v174 = vxor.u32 %v170, 2147483648
  %v175 = vmul.f32 %v171, 1.442695
  %v176 = vpow.pop %v175
  %v177 = vmul.f32 %v172, 1.442695
  %v178 = vpow.pop %v177
  %v179 = vmul.f32 %v173, 1.442695
  %v180 = vpow.pop %v179
  %v181 = vmul.f32 %v174, 1.442695
  %v182 = vpow.pop %v181
  %v183 = vadd.f32 %v176, 1.0
  %v184 = vadd.f32 %v178, 1.0
  %v185 = vadd.f32 %v180, 1.0
  %v186 = vadd.f32 %v182, 1.0
  %v187 = vrcp.pop %v183
  %v188 = vmul.f32 %v183, %v187
  %v189 = vsub.f32 1.0, %v188
  %v190 = vmul.f32 %v187, %v189
  %v191 = vadd.f32 %v187, %v190
  %vm192 = vweird.f32 %v183
  %vm193 = vweird.f32 %v187
  %vm194 = vmor %vm192, %vm193
  %v195 = vsel %vm194, %v187, %v191
  %v196 = vand.u32 2147483647, %v183
  %vm197 = vcmp.eq.f32.partialorder %v196, 8.507059e+37
  %v198 = vand.u32 %v183, 2147483648
  %v199 = vor.u32 1.1754944e-38, %v198
  %v200 = vsel %vm197, %v199, %v195
  %v201 = vmul.f32 1.0, %v200
  %v202 = vrcp.pop %v184
  %v203 = vmul.f32 %v184, %v202
  %v204 = vsub.f32 1.0, %v203
  %v205 = vmul.f32 %v202, %v204
  %v206 = vadd.f32 %v202, %v205
  %vm207 = vweird.f32 %v184
  %vm208 = vweird.f32 %v202
  %vm209 = vmor %vm207, %vm208
  %v210 = vsel %vm209, %v202, %v206
  %v211 = vand.u32 2147483647, %v184
  %vm212 = vcmp.eq.f32.partialorder %v211, 8.507059e+37
  %v213 = vand.u32 %v184, 2147483648
  %v214 = vor.u32 1.1754944e-38, %v213
  %v215 = vsel %vm212, %v214, %v210
  %v216 = vmul.f32 1.0, %v215
  %v217 = vrcp.pop %v185
  %v218 = vmul.f32 %v185, %v217
  %v219 = vsub.f32 1.0, %v218
  %v220 = vmul.f32 %v217, %v219
  %v221 = vadd.f32 %v217, %v220
  %vm222 = vweird.f32 %v185
  %vm223 = vweird.f32 %v217
  %vm224 = vmor %vm222, %vm223
  %v225 = vsel %vm224, %v217, %v221
  %v226 = vand.u32 2147483647, %v185
  %vm227 = vcmp.eq.f32.partialorder %v226, 8.507059e+37
  %v228 = vand.u32 %v185, 2147483648
  %v229 = vor.u32 1.1754944e-38, %v228
  %v230 = vsel %vm227, %v229, %v225
  %v231 = vmul.f32 1.0, %v230
  %v232 = vrcp.pop %v186
  %v233 = vmul.f32 %v186, %v232
  %v234 = vsub.f32 1.0, %v233
  %v235 = vmul.f32 %v232, %v234
  %v236 = vadd.f32 %v232, %v235
  %vm237 = vweird.f32 %v186
  %vm238 = vweird.f32 %v232
  %vm239 = vmor %vm237, %vm238
  %v240 = vsel %vm239, %v232, %v236
  %v241 = vand.u32 2147483647, %v186
  %vm242 = vcmp.eq.f32.partialorder %v241, 8.507059e+37
  %v243 = vand.u32 %v186, 2147483648
  %v244 = vor.u32 1.1754944e-38, %v243
  %v245 = vsel %vm242, %v244, %v240
  %v246 = vmul.f32 1.0, %v245
  %v247 = vmul.f32 %v167, %v201
  %v248 = vmul.f32 %v168, %v216
  %v249 = vmul.f32 %v169, %v231
  %v250 = vmul.f32 %v170, %v246
  %v251 = vsub.s32 %v34, 1
  %vm252 = vcmp.ge.s32.totalorder %v251, 0
  %v253 = vadd.s32 %v34, 1
  %vm254 = vcmp.lt.s32.totalorder %v253, 16
  %v255 = vsub.s32 %v35, 1
  %vm256 = vcmp.ge.s32.totalorder %v255, 0
  %v257 = vadd.s32 %v35, 1
  %vm258 = vcmp.lt.s32.totalorder %v257, 16
  %v259 = vsub.s32 %v34, 2
  %vm260 = vcmp.ge.s32.totalorder %v259, 0
  %v261 = vadd.s32 %v34, 2
  %vm262 = vcmp.lt.s32.totalorder %v261, 16
  %v263 = vsub.s32 %v35, 2
  %vm264 = vcmp.ge.s32.totalorder %v263, 0
  %v265 = vadd.s32 %v35, 2
  %vm266 = vcmp.lt.s32.totalorder %v265, 16
  %v267 = vsub.s32 %v34, 3
  %vm268 = vcmp.ge.s32.totalorder %v267, 0
  %v269 = vadd.s32 %v34, 3
  %vm270 = vcmp.lt.s32.totalorder %v269, 16
  %v271 = vsub.s32 %v35, 3
  %vm272 = vcmp.ge.s32.totalorder %v271, 0
  %v273 = vadd.s32 %v35, 3
  %vm274 = vcmp.lt.s32.totalorder %v273, 16
  %276 = vset.pattern.permute.xlu0 0
  %277 = vperm.xlu0 %276, %v48
  %v278 = vpop.permute.xlu0 %277
  %v280 = vperm.slane %v247, 0
  %v281 = vperm.slane %v248, 0
  %v282 = vperm.slane %v249, 0
  %v283 = vperm.slane %v250, 0
  %v284 = vmul.f32 %v278, %v280
  %v285 = vmul.f32 %v278, %v281
  %v286 = vmul.f32 %v278, %v282
  %v287 = vmul.f32 %v278, %v283
  %v288 = vadd.f32 %v284, 0.0
  %v289 = vadd.f32 %v285, 0.0
  %v290 = vadd.f32 %v286, 0.0
  %v291 = vadd.f32 %v287, 0.0
  %293 = vset.pattern.permute.xlu0 0
  %294 = vperm.xlu0 %293, %v49
  %v295 = vpop.permute.xlu0 %294
  %v297 = vperm.slane %v247, 1
  %v298 = vperm.slane %v248, 1
  %v299 = vperm.slane %v249, 1
  %v300 = vperm.slane %v250, 1
  %v301 = vmul.f32 %v295, %v297
  %v302 = vmul.f32 %v295, %v298
  %v303 = vmul.f32 %v295, %v299
  %v304 = vmul.f32 %v295, %v300
  %v305 = vadd.f32 %v288, %v301
  %v306 = vadd.f32 %v289, %v302
  %v307 = vadd.f32 %v290, %v303
  %v308 = vadd.f32 %v291, %v304
  %310 = vset.pattern.permute.xlu0 0
  %311 = vperm.xlu0 %310, %v59
  %v312 = vpop.permute.xlu0 %311
  %v314 = vadd.f32 %v305, %v312
  %v315 = vadd.f32 %v306, %v312
  %v316 = vadd.f32 %v307, %v312
  %v317 = vadd.f32 %v308, %v312
  %318 = vst [vmem:[#allocation1] ss:$2 sm:$0xff] %v32
  %s319 = scalar_lea.vmem [#allocation1], 16
  %320 = vst [vmem:[%s319] ss:$2 sm:$0xff] %v33
  %v321 = vld.sshfl [vmem:[#allocation1] sm:$0xff pattern:$0x75316420]
  %v322 = vld.sshfl [vmem:[#allocation1 + $0x8] sm:$0xff pattern:$0x75316420]
  %v323 = vld.sshfl [vmem:[#allocation1 + $0x10] sm:$0xff pattern:$0x75316420]
  %v324 = vld.sshfl [vmem:[#allocation1 + $0x18] sm:$0xff pattern:$0x75316420]
  %v329 = vadd.f32 %v314, %v321
  %v330 = vadd.f32 %v315, %v322
  %v331 = vadd.f32 %v316, %v323
  %v332 = vadd.f32 %v317, %v324
  %333 = vrot.lane.b32.xlu0 %v247, 17
  %v334 = vpop.permute.xlu0 %333
  %335 = vrot.lane.b32.xlu0 %v248, 17
  %v336 = vpop.permute.xlu0 %335
  %337 = vrot.lane.b32.xlu0 %v249, 17
  %v338 = vpop.permute.xlu0 %337
  %339 = vrot.lane.b32.xlu0 %v250, 17
  %v340 = vpop.permute.xlu0 %339
  %v341 = vlaneseq
  %v342 = vand.u32 %v341, 127
  %vm343 = vcmp.lt.s32.totalorder %v342, 17
  %v344 = vsel %vm343, %v338, %v340
  %v345 = vsel %vm343, %v336, %v338
  %v346 = vsel %vm343, %v334, %v336
  %v347 = vsel %vm343, %v340, %v334
  %vm348 = vmand %vm252, %vm256
  %v349 = vsel %vm348, 1, 0
  %v350 = vperm.slane %v349, 0
  %v351 = vperm.slane %v349, 1
  %v352 = vperm.slane %v349, 2
  %v353 = vperm.slane %v349, 3
  %vm354 = vcmp.eq.s32.totalorder %v350, 1
  %vm355 = vcmp.eq.s32.totalorder %v351, 1
  %vm356 = vcmp.eq.s32.totalorder %v352, 1
  %vm357 = vcmp.eq.s32.totalorder %v353, 1
  %v358 = vsel %vm354, %v347, 0.0
  %v359 = vsel %vm355, %v346, 0.0
  %v360 = vsel %vm356, %v345, 0.0
  %v361 = vsel %vm357, %v344, 0.0
  %363 = vset.pattern.permute.xlu0 0
  %364 = vperm.xlu0 %363, %v40
  %v365 = vpop.permute.xlu0 %364
  %v367 = vperm.slane %v358, 0
  %v368 = vperm.slane %v359, 0
  %v369 = vperm.slane %v360, 0
  %v370 = vperm.slane %v361, 0
  %v371 = vmul.f32 %v365, %v367
  %v372 = vmul.f32 %v365, %v368
  %v373 = vmul.f32 %v365, %v369
  %v374 = vmul.f32 %v365, %v370
  %v375 = vadd.f32 %v329, %v371
  %v376 = vadd.f32 %v330, %v372
  %v377 = vadd.f32 %v331, %v373
  %v378 = vadd.f32 %v332, %v374
  %380 = vset.pattern.permute.xlu0 0
  %381 = vperm.xlu0 %380, %v41
  %v382 = vpop.permute.xlu0 %381
  %v384 = vperm.slane %v358, 1
  %v385 = vperm.slane %v359, 1
  %v386 = vperm.slane %v360, 1
  %v387 = vperm.slane %v361, 1
  %v388 = vmul.f32 %v382, %v384
  %v389 = vmul.f32 %v382, %v385
  %v390 = vmul.f32 %v382, %v386
  %v391 = vmul.f32 %v382, %v387
  %v392 = vadd.f32 %v375, %v388
  %v393 = vadd.f32 %v376, %v389
  %v394 = vadd.f32 %v377, %v390
  %v395 = vadd.f32 %v378, %v391
  %396 = vrot.lane.b32.xlu0 %v247, 16
  %v397 = vpop.permute.xlu0 %396
  %398 = vrot.lane.b32.xlu0 %v248, 16
  %v399 = vpop.permute.xlu0 %398
  %400 = vrot.lane.b32.xlu0 %v249, 16
  %v401 = vpop.permute.xlu0 %400
  %402 = vrot.lane.b32.xlu0 %v250, 16
  %v403 = vpop.permute.xlu0 %402
  %vm404 = vcmp.lt.s32.totalorder %v342, 16
  %v405 = vsel %vm404, %v401, %v403
  %v406 = vsel %vm404, %v399, %v401
  %v407 = vsel %vm404, %v397, %v399
  %v408 = vsel %vm404, %v403, %v397
  %v409 = vsel %vm252, 1, 0
  %v410 = vperm.slane %v409, 0
  %v411 = vperm.slane %v409, 1
  %v412 = vperm.slane %v409, 2
  %v413 = vperm.slane %v409, 3
  %vm414 = vcmp.eq.s32.totalorder %v410, 1
  %vm415 = vcmp.eq.s32.totalorder %v411, 1
  %vm416 = vcmp.eq.s32.totalorder %v412, 1
  %vm417 = vcmp.eq.s32.totalorder %v413, 1
  %v418 = vsel %vm414, %v408, 0.0
  %v419 = vsel %vm415, %v407, 0.0
  %v420 = vsel %vm416, %v406, 0.0
  %v421 = vsel %vm417, %v405, 0.0
  %423 = vset.pattern.permute.xlu0 0
  %424 = vperm.xlu0 %423, %v42
  %v425 = vpop.permute.xlu0 %424
  %v427 = vperm.slane %v418, 0
  %v428 = vperm.slane %v419, 0
  %v429 = vperm.slane %v420, 0
  %v430 = vperm.slane %v421, 0
  %v431 = vmul.f32 %v425, %v427
  %v432 = vmul.f32 %v425, %v428
  %v433 = vmul.f32 %v425, %v429
  %v434 = vmul.f32 %v425, %v430
  %v435 = vadd.f32 %v392, %v431
  %v436 = vadd.f32 %v393, %v432
  %v437 = vadd.f32 %v394, %v433
  %v438 = vadd.f32 %v395, %v434
  %440 = vset.pattern.permute.xlu0 0
  %441 = vperm.xlu0 %440, %v43
  %v442 = vpop.permute.xlu0 %441
  %v444 = vperm.slane %v418, 1
  %v445 = vperm.slane %v419, 1
  %v446 = vperm.slane %v420, 1
  %v447 = vperm.slane %v421, 1
  %v448 = vmul.f32 %v442, %v444
  %v449 = vmul.f32 %v442, %v445
  %v450 = vmul.f32 %v442, %v446
  %v451 = vmul.f32 %v442, %v447
  %v452 = vadd.f32 %v435, %v448
  %v453 = vadd.f32 %v436, %v449
  %v454 = vadd.f32 %v437, %v450
  %v455 = vadd.f32 %v438, %v451
  %456 = vrot.lane.b32.xlu0 %v247, 15
  %v457 = vpop.permute.xlu0 %456
  %458 = vrot.lane.b32.xlu0 %v248, 15
  %v459 = vpop.permute.xlu0 %458
  %460 = vrot.lane.b32.xlu0 %v249, 15
  %v461 = vpop.permute.xlu0 %460
  %462 = vrot.lane.b32.xlu0 %v250, 15
  %v463 = vpop.permute.xlu0 %462
  %vm464 = vcmp.lt.s32.totalorder %v342, 15
  %v465 = vsel %vm464, %v461, %v463
  %v466 = vsel %vm464, %v459, %v461
  %v467 = vsel %vm464, %v457, %v459
  %v468 = vsel %vm464, %v463, %v457
  %vm469 = vmand %vm252, %vm258
  %v470 = vsel %vm469, 1, 0
  %v471 = vperm.slane %v470, 0
  %v472 = vperm.slane %v470, 1
  %v473 = vperm.slane %v470, 2
  %v474 = vperm.slane %v470, 3
  %vm475 = vcmp.eq.s32.totalorder %v471, 1
  %vm476 = vcmp.eq.s32.totalorder %v472, 1
  %vm477 = vcmp.eq.s32.totalorder %v473, 1
  %vm478 = vcmp.eq.s32.totalorder %v474, 1
  %v479 = vsel %vm475, %v468, 0.0
  %v480 = vsel %vm476, %v467, 0.0
  %v481 = vsel %vm477, %v466, 0.0
  %v482 = vsel %vm478, %v465, 0.0
  %484 = vset.pattern.permute.xlu0 0
  %485 = vperm.xlu0 %484, %v44
  %v486 = vpop.permute.xlu0 %485
  %v488 = vperm.slane %v479, 0
  %v489 = vperm.slane %v480, 0
  %v490 = vperm.slane %v481, 0
  %v491 = vperm.slane %v482, 0
  %v492 = vmul.f32 %v486, %v488
  %v493 = vmul.f32 %v486, %v489
  %v494 = vmul.f32 %v486, %v490
  %v495 = vmul.f32 %v486, %v491
  %v496 = vadd.f32 %v452, %v492
  %v497 = vadd.f32 %v453, %v493
  %v498 = vadd.f32 %v454, %v494
  %v499 = vadd.f32 %v455, %v495
  %501 = vset.pattern.permute.xlu0 0
  %502 = vperm.xlu0 %501, %v45
  %v503 = vpop.permute.xlu0 %502
  %v505 = vperm.slane %v479, 1
  %v506 = vperm.slane %v480, 1
  %v507 = vperm.slane %v481, 1
  %v508 = vperm.slane %v482, 1
  %v509 = vmul.f32 %v503, %v505
  %v510 = vmul.f32 %v503, %v506
  %v511 = vmul.f32 %v503, %v507
  %v512 = vmul.f32 %v503, %v508
  %v513 = vadd.f32 %v496, %v509
  %v514 = vadd.f32 %v497, %v510
  %v515 = vadd.f32 %v498, %v511
  %v516 = vadd.f32 %v499, %v512
  %517 = vrot.lane.b32.xlu0 %v247, 1
  %v518 = vpop.permute.xlu0 %517
  %519 = vrot.lane.b32.xlu0 %v248, 1
  %v520 = vpop.permute.xlu0 %519
  %521 = vrot.lane.b32.xlu0 %v249, 1
  %v522 = vpop.permute.xlu0 %521
  %523 = vrot.lane.b32.xlu0 %v250, 1
  %v524 = vpop.permute.xlu0 %523
  %vm525 = vcmp.lt.s32.totalorder %v342, 1
  %v526 = vsel %vm525, %v522, %v524
  %v527 = vsel %vm525, %v520, %v522
  %v528 = vsel %vm525, %v518, %v520
  %v529 = vsel %vm525, %v524, %v518
  %v530 = vsel %vm256, 1, 0
  %v531 = vperm.slane %v530, 0
  %v532 = vperm.slane %v530, 1
  %v533 = vperm.slane %v530, 2
  %v534 = vperm.slane %v530, 3
  %vm535 = vcmp.eq.s32.totalorder %v531, 1
  %vm536 = vcmp.eq.s32.totalorder %v532, 1
  %vm537 = vcmp.eq.s32.totalorder %v533, 1
  %vm538 = vcmp.eq.s32.totalorder %v534, 1
  %v539 = vsel %vm535, %v529, 0.0
  %v540 = vsel %vm536, %v528, 0.0
  %v541 = vsel %vm537, %v527, 0.0
  %v542 = vsel %vm538, %v526, 0.0
  %544 = vset.pattern.permute.xlu0 0
  %545 = vperm.xlu0 %544, %v46
  %v546 = vpop.permute.xlu0 %545
  %v548 = vperm.slane %v539, 0
  %v549 = vperm.slane %v540, 0
  %v550 = vperm.slane %v541, 0
  %v551 = vperm.slane %v542, 0
  %v552 = vmul.f32 %v546, %v548
  %v553 = vmul.f32 %v546, %v549
  %v554 = vmul.f32 %v546, %v550
  %v555 = vmul.f32 %v546, %v551
  %v556 = vadd.f32 %v513, %v552
  %v557 = vadd.f32 %v514, %v553
  %v558 = vadd.f32 %v515, %v554
  %v559 = vadd.f32 %v516, %v555
  %561 = vset.pattern.permute.xlu0 0
  %562 = vperm.xlu0 %561, %v47
  %v563 = vpop.permute.xlu0 %562
  %v565 = vperm.slane %v539, 1
  %v566 = vperm.slane %v540, 1
  %v567 = vperm.slane %v541, 1
  %v568 = vperm.slane %v542, 1
  %v569 = vmul.f32 %v563, %v565
  %v570 = vmul.f32 %v563, %v566
  %v571 = vmul.f32 %v563, %v567
  %v572 = vmul.f32 %v563, %v568
  %v573 = vadd.f32 %v556, %v569
  %v574 = vadd.f32 %v557, %v570
  %v575 = vadd.f32 %v558, %v571
  %v576 = vadd.f32 %v559, %v572
  %577 = vrot.lane.b32.xlu0 %v247, 127
  %v578 = vpop.permute.xlu0 %577
  %579 = vrot.lane.b32.xlu0 %v248, 127
  %v580 = vpop.permute.xlu0 %579
  %581 = vrot.lane.b32.xlu0 %v249, 127
  %v582 = vpop.permute.xlu0 %581
  %583 = vrot.lane.b32.xlu0 %v250, 127
  %v584 = vpop.permute.xlu0 %583
  %vm585 = vcmp.lt.s32.totalorder %v342, 127
  %v586 = vsel %vm585, %v582, %v584
  %v587 = vsel %vm585, %v580, %v582
  %v588 = vsel %vm585, %v578, %v580
  %v589 = vsel %vm585, %v584, %v578
  %v590 = vsel %vm258, 1, 0
  %v591 = vperm.slane %v590, 0
  %v592 = vperm.slane %v590, 1
  %v593 = vperm.slane %v590, 2
  %v594 = vperm.slane %v590, 3
  %vm595 = vcmp.eq.s32.totalorder %v591, 1
  %vm596 = vcmp.eq.s32.totalorder %v592, 1
  %vm597 = vcmp.eq.s32.totalorder %v593, 1
  %vm598 = vcmp.eq.s32.totalorder %v594, 1
  %v599 = vsel %vm595, %v588, 0.0
  %v600 = vsel %vm596, %v587, 0.0
  %v601 = vsel %vm597, %v586, 0.0
  %v602 = vsel %vm598, %v589, 0.0
  %604 = vset.pattern.permute.xlu0 0
  %605 = vperm.xlu0 %604, %v50
  %v606 = vpop.permute.xlu0 %605
  %v608 = vperm.slane %v599, 0
  %v609 = vperm.slane %v600, 0
  %v610 = vperm.slane %v601, 0
  %v611 = vperm.slane %v602, 0
  %v612 = vmul.f32 %v606, %v608
  %v613 = vmul.f32 %v606, %v609
  %v614 = vmul.f32 %v606, %v610
  %v615 = vmul.f32 %v606, %v611
  %v616 = vadd.f32 %v573, %v612
  %v617 = vadd.f32 %v574, %v613
  %v618 = vadd.f32 %v575, %v614
  %v619 = vadd.f32 %v576, %v615
  %621 = vset.pattern.permute.xlu0 0
  %622 = vperm.xlu0 %621, %v51
  %v623 = vpop.permute.xlu0 %622
  %v625 = vperm.slane %v599, 1
  %v626 = vperm.slane %v600, 1
  %v627 = vperm.slane %v601, 1
  %v628 = vperm.slane %v602, 1
  %v629 = vmul.f32 %v623, %v625
  %v630 = vmul.f32 %v623, %v626
  %v631 = vmul.f32 %v623, %v627
  %v632 = vmul.f32 %v623, %v628
  %v633 = vadd.f32 %v616, %v629
  %v634 = vadd.f32 %v617, %v630
  %v635 = vadd.f32 %v618, %v631
  %v636 = vadd.f32 %v619, %v632
  %637 = vrot.lane.b32.xlu0 %v247, 113
  %v638 = vpop.permute.xlu0 %637
  %639 = vrot.lane.b32.xlu0 %v248, 113
  %v640 = vpop.permute.xlu0 %639
  %641 = vrot.lane.b32.xlu0 %v249, 113
  %v642 = vpop.permute.xlu0 %641
  %643 = vrot.lane.b32.xlu0 %v250, 113
  %v644 = vpop.permute.xlu0 %643
  %vm645 = vcmp.lt.s32.totalorder %v342, 113
  %v646 = vsel %vm645, %v642, %v644
  %v647 = vsel %vm645, %v640, %v642
  %v648 = vsel %vm645, %v638, %v640
  %v649 = vsel %vm645, %v644, %v638
  %vm650 = vmand %vm254, %vm256
  %v651 = vsel %vm650, 1, 0
  %v652 = vperm.slane %v651, 0
  %v653 = vperm.slane %v651, 1
  %v654 = vperm.slane %v651, 2
  %v655 = vperm.slane %v651, 3
  %vm656 = vcmp.eq.s32.totalorder %v652, 1
  %vm657 = vcmp.eq.s32.totalorder %v653, 1
  %vm658 = vcmp.eq.s32.totalorder %v654, 1
  %vm659 = vcmp.eq.s32.totalorder %v655, 1
  %v660 = vsel %vm656, %v648, 0.0
  %v661 = vsel %vm657, %v647, 0.0
  %v662 = vsel %vm658, %v646, 0.0
  %v663 = vsel %vm659, %v649, 0.0
  %665 = vset.pattern.permute.xlu0 0
  %666 = vperm.xlu0 %665, %v52
  %v667 = vpop.permute.xlu0 %666
  %v669 = vperm.slane %v660, 0
  %v670 = vperm.slane %v661, 0
  %v671 = vperm.slane %v662, 0
  %v672 = vperm.slane %v663, 0
  %v673 = vmul.f32 %v667, %v669
  %v674 = vmul.f32 %v667, %v670
  %v675 = vmul.f32 %v667, %v671
  %v676 = vmul.f32 %v667, %v672
  %v677 = vadd.f32 %v633, %v673
  %v678 = vadd.f32 %v634, %v674
  %v679 = vadd.f32 %v635, %v675
  %v680 = vadd.f32 %v636, %v676
  %682 = vset.pattern.permute.xlu0 0
  %683 = vperm.xlu0 %682, %v53
  %v684 = vpop.permute.xlu0 %683
  %v686 = vperm.slane %v660, 1
  %v687 = vperm.slane %v661, 1
  %v688 = vperm.slane %v662, 1
  %v689 = vperm.slane %v663, 1
  %v690 = vmul.f32 %v684, %v686
  %v691 = vmul.f32 %v684, %v687
  %v692 = vmul.f32 %v684, %v688
  %v693 = vmul.f32 %v684, %v689
  %v694 = vadd.f32 %v677, %v690
  %v695 = vadd.f32 %v678, %v691
  %v696 = vadd.f32 %v679, %v692
  %v697 = vadd.f32 %v680, %v693
  %698 = vrot.lane.b32.xlu0 %v247, 112
  %v699 = vpop.permute.xlu0 %698
  %700 = vrot.lane.b32.xlu0 %v248, 112
  %v701 = vpop.permute.xlu0 %700
  %702 = vrot.lane.b32.xlu0 %v249, 112
  %v703 = vpop.permute.xlu0 %702
  %704 = vrot.lane.b32.xlu0 %v250, 112
  %v705 = vpop.permute.xlu0 %704
  %vm706 = vcmp.lt.s32.totalorder %v342, 112
  %v707 = vsel %vm706, %v703, %v705
  %v708 = vsel %vm706, %v701, %v703
  %v709 = vsel %vm706, %v699, %v701
  %v710 = vsel %vm706, %v705, %v699
  %v711 = vsel %vm254, 1, 0
  %v712 = vperm.slane %v711, 0
  %v713 = vperm.slane %v711, 1
  %v714 = vperm.slane %v711, 2
  %v715 = vperm.slane %v711, 3
  %vm716 = vcmp.eq.s32.totalorder %v712, 1
  %vm717 = vcmp.eq.s32.totalorder %v713, 1
  %vm718 = vcmp.eq.s32.totalorder %v714, 1
  %vm719 = vcmp.eq.s32.totalorder %v715, 1
  %v720 = vsel %vm716, %v709, 0.0
  %v721 = vsel %vm717, %v708, 0.0
  %v722 = vsel %vm718, %v707, 0.0
  %v723 = vsel %vm719, %v710, 0.0
  %725 = vset.pattern.permute.xlu0 0
  %726 = vperm.xlu0 %725, %v54
  %v727 = vpop.permute.xlu0 %726
  %v729 = vperm.slane %v720, 0
  %v730 = vperm.slane %v721, 0
  %v731 = vperm.slane %v722, 0
  %v732 = vperm.slane %v723, 0
  %v733 = vmul.f32 %v727, %v729
  %v734 = vmul.f32 %v727, %v730
  %v735 = vmul.f32 %v727, %v731
  %v736 = vmul.f32 %v727, %v732
  %v737 = vadd.f32 %v694, %v733
  %v738 = vadd.f32 %v695, %v734
  %v739 = vadd.f32 %v696, %v735
  %v740 = vadd.f32 %v697, %v736
  %742 = vset.pattern.permute.xlu0 0
  %743 = vperm.xlu0 %742, %v55
  %v744 = vpop.permute.xlu0 %743
  %v746 = vperm.slane %v720, 1
  %v747 = vperm.slane %v721, 1
  %v748 = vperm.slane %v722, 1
  %v749 = vperm.slane %v723, 1
  %v750 = vmul.f32 %v744, %v746
  %v751 = vmul.f32 %v744, %v747
  %v752 = vmul.f32 %v744, %v748
  %v753 = vmul.f32 %v744, %v749
  %v754 = vadd.f32 %v737, %v750
  %v755 = vadd.f32 %v738, %v751
  %v756 = vadd.f32 %v739, %v752
  %v757 = vadd.f32 %v740, %v753
  %758 = vrot.lane.b32.xlu0 %v247, 111
  %v759 = vpop.permute.xlu0 %758
  %760 = vrot.lane.b32.xlu0 %v248, 111
  %v761 = vpop.permute.xlu0 %760
  %762 = vrot.lane.b32.xlu0 %v249, 111
  %v763 = vpop.permute.xlu0 %762
  %764 = vrot.lane.b32.xlu0 %v250, 111
  %v765 = vpop.permute.xlu0 %764
  %vm766 = vcmp.lt.s32.totalorder %v342, 111
  %v767 = vsel %vm766, %v763, %v765
  %v768 = vsel %vm766, %v761, %v763
  %v769 = vsel %vm766, %v759, %v761
  %v770 = vsel %vm766, %v765, %v759
  %vm771 = vmand %vm254, %vm258
  %v772 = vsel %vm771, 1, 0
  %v773 = vperm.slane %v772, 0
  %v774 = vperm.slane %v772, 1
  %v775 = vperm.slane %v772, 2
  %v776 = vperm.slane %v772, 3
  %vm777 = vcmp.eq.s32.totalorder %v773, 1
  %vm778 = vcmp.eq.s32.totalorder %v774, 1
  %vm779 = vcmp.eq.s32.totalorder %v775, 1
  %vm780 = vcmp.eq.s32.totalorder %v776, 1
  %v781 = vsel %vm777, %v769, 0.0
  %v782 = vsel %vm778, %v768, 0.0
  %v783 = vsel %vm779, %v767, 0.0
  %v784 = vsel %vm780, %v770, 0.0
  %786 = vset.pattern.permute.xlu0 0
  %787 = vperm.xlu0 %786, %v56
  %v788 = vpop.permute.xlu0 %787
  %v790 = vperm.slane %v781, 0
  %v791 = vperm.slane %v782, 0
  %v792 = vperm.slane %v783, 0
  %v793 = vperm.slane %v784, 0
  %v794 = vmul.f32 %v788, %v790
  %v795 = vmul.f32 %v788, %v791
  %v796 = vmul.f32 %v788, %v792
  %v797 = vmul.f32 %v788, %v793
  %v798 = vadd.f32 %v754, %v794
  %v799 = vadd.f32 %v755, %v795
  %v800 = vadd.f32 %v756, %v796
  %v801 = vadd.f32 %v757, %v797
  %803 = vset.pattern.permute.xlu0 0
  %804 = vperm.xlu0 %803, %v57
  %v805 = vpop.permute.xlu0 %804
  %v807 = vperm.slane %v781, 1
  %v808 = vperm.slane %v782, 1
  %v809 = vperm.slane %v783, 1
  %v810 = vperm.slane %v784, 1
  %v811 = vmul.f32 %v805, %v807
  %v812 = vmul.f32 %v805, %v808
  %v813 = vmul.f32 %v805, %v809
  %v814 = vmul.f32 %v805, %v810
  %v815 = vadd.f32 %v798, %v811
  %v816 = vadd.f32 %v799, %v812
  %v817 = vadd.f32 %v800, %v813
  %v818 = vadd.f32 %v801, %v814
  %v819 = vxor.u32 %v815, 2147483648
  %v820 = vxor.u32 %v816, 2147483648
  %v821 = vxor.u32 %v817, 2147483648
  %v822 = vxor.u32 %v818, 2147483648
  %v823 = vmul.f32 %v819, 1.442695
  %v824 = vpow.pop %v823
  %v825 = vmul.f32 %v820, 1.442695
  %v826 = vpow.pop %v825
  %v827 = vmul.f32 %v821, 1.442695
  %v828 = vpow.pop %v827
  %v829 = vmul.f32 %v822, 1.442695
  %v830 = vpow.pop %v829
  %v831 = vadd.f32 %v824, 1.0
  %v832 = vadd.f32 %v826, 1.0
  %v833 = vadd.f32 %v828, 1.0
  %v834 = vadd.f32 %v830, 1.0
  %v835 = vrcp.pop %v831
  %v836 = vmul.f32 %v831, %v835
  %v837 = vsub.f32 1.0, %v836
  %v838 = vmul.f32 %v835, %v837
  %v839 = vadd.f32 %v835, %v838
  %vm840 = vweird.f32 %v831
  %vm841 = vweird.f32 %v835
  %vm842 = vmor %vm840, %vm841
  %v843 = vsel %vm842, %v835, %v839
  %v844 = vand.u32 2147483647, %v831
  %vm845 = vcmp.eq.f32.partialorder %v844, 8.507059e+37
  %v846 = vand.u32 %v831, 2147483648
  %v847 = vor.u32 1.1754944e-38, %v846
  %v848 = vsel %vm845, %v847, %v843
  %v849 = vmul.f32 1.0, %v848
  %v850 = vrcp.pop %v832
  %v851 = vmul.f32 %v832, %v850
  %v852 = vsub.f32 1.0, %v851
  %v853 = vmul.f32 %v850, %v852
  %v854 = vadd.f32 %v850, %v853
  %vm855 = vweird.f32 %v832
  %vm856 = vweird.f32 %v850
  %vm857 = vmor %vm855, %vm856
  %v858 = vsel %vm857, %v850, %v854
  %v859 = vand.u32 2147483647, %v832
  %vm860 = vcmp.eq.f32.partialorder %v859, 8.507059e+37
  %v861 = vand.u32 %v832, 2147483648
  %v862 = vor.u32 1.1754944e-38, %v861
  %v863 = vsel %vm860, %v862, %v858
  %v864 = vmul.f32 1.0, %v863
  %v865 = vrcp.pop %v833
  %v866 = vmul.f32 %v833, %v865
  %v867 = vsub.f32 1.0, %v866
  %v868 = vmul.f32 %v865, %v867
  %v869 = vadd.f32 %v865, %v868
  %vm870 = vweird.f32 %v833
  %vm871 = vweird.f32 %v865
  %vm872 = vmor %vm870, %vm871
  %v873 = vsel %vm872, %v865, %v869
  %v874 = vand.u32 2147483647, %v833
  %vm875 = vcmp.eq.f32.partialorder %v874, 8.507059e+37
  %v876 = vand.u32 %v833, 2147483648
  %v877 = vor.u32 1.1754944e-38, %v876
  %v878 = vsel %vm875, %v877, %v873
  %v879 = vmul.f32 1.0, %v878
  %v880 = vrcp.pop %v834
  %v881 = vmul.f32 %v834, %v880
  %v882 = vsub.f32 1.0, %v881
  %v883 = vmul.f32 %v880, %v882
  %v884 = vadd.f32 %v880, %v883
  %vm885 = vweird.f32 %v834
  %vm886 = vweird.f32 %v880
  %vm887 = vmor %vm885, %vm886
  %v888 = vsel %vm887, %v880, %v884
  %v889 = vand.u32 2147483647, %v834
  %vm890 = vcmp.eq.f32.partialorder %v889, 8.507059e+37
  %v891 = vand.u32 %v834, 2147483648
  %v892 = vor.u32 1.1754944e-38, %v891
  %v893 = vsel %vm890, %v892, %v888
  %v894 = vmul.f32 1.0, %v893
  %v895 = vmul.f32 %v815, %v849
  %v896 = vmul.f32 %v816, %v864
  %v897 = vmul.f32 %v817, %v879
  %v898 = vmul.f32 %v818, %v894
  %v899 = vadd.f32 %v895, 0.0
  %v900 = vadd.f32 %v896, 0.0
  %v901 = vadd.f32 %v897, 0.0
  %v902 = vadd.f32 %v898, 0.0
  %903 = vrot.lane.b32.xlu0 %v247, 34
  %v904 = vpop.permute.xlu0 %903
  %905 = vrot.lane.b32.xlu0 %v248, 34
  %v906 = vpop.permute.xlu0 %905
  %907 = vrot.lane.b32.xlu0 %v249, 34
  %v908 = vpop.permute.xlu0 %907
  %909 = vrot.lane.b32.xlu0 %v250, 34
  %v910 = vpop.permute.xlu0 %909
  %vm911 = vcmp.lt.s32.totalorder %v342, 34
  %v912 = vsel %vm911, %v908, %v910
  %v913 = vsel %vm911, %v906, %v908
  %v914 = vsel %vm911, %v904, %v906
  %v915 = vsel %vm911, %v910, %v904
  %vm916 = vmand %vm260, %vm264
  %v917 = vsel %vm916, 1, 0
  %v918 = vperm.slane %v917, 0
  %v919 = vperm.slane %v917, 1
  %v920 = vperm.slane %v917, 2
  %v921 = vperm.slane %v917, 3
  %vm922 = vcmp.eq.s32.totalorder %v918, 1
  %vm923 = vcmp.eq.s32.totalorder %v919, 1
  %vm924 = vcmp.eq.s32.totalorder %v920, 1
  %vm925 = vcmp.eq.s32.totalorder %v921, 1
  %v926 = vsel %vm922, %v915, 0.0
  %v927 = vsel %vm923, %v914, 0.0
  %v928 = vsel %vm924, %v913, 0.0
  %v929 = vsel %vm925, %v912, 0.0
  %v930 = vperm.slane %v926, 0
  %v931 = vperm.slane %v927, 0
  %v932 = vperm.slane %v928, 0
  %v933 = vperm.slane %v929, 0
  %v934 = vmul.f32 %v365, %v930
  %v935 = vmul.f32 %v365, %v931
  %v936 = vmul.f32 %v365, %v932
  %v937 = vmul.f32 %v365, %v933
  %v938 = vadd.f32 %v329, %v934
  %v939 = vadd.f32 %v330, %v935
  %v940 = vadd.f32 %v331, %v936
  %v941 = vadd.f32 %v332, %v937
  %v942 = vperm.slane %v926, 1
  %v943 = vperm.slane %v927, 1
  %v944 = vperm.slane %v928, 1
  %v945 = vperm.slane %v929, 1
  %v946 = vmul.f32 %v382, %v942
  %v947 = vmul.f32 %v382, %v943
  %v948 = vmul.f32 %v382, %v944
  %v949 = vmul.f32 %v382, %v945
  %v950 = vadd.f32 %v938, %v946
  %v951 = vadd.f32 %v939, %v947
  %v952 = vadd.f32 %v940, %v948
  %v953 = vadd.f32 %v941, %v949
  %954 = vrot.lane.b32.xlu0 %v247, 32
  %v955 = vpop.permute.xlu0 %954
  %956 = vrot.lane.b32.xlu0 %v248, 32
  %v957 = vpop.permute.xlu0 %956
  %958 = vrot.lane.b32.xlu0 %v249, 32
  %v959 = vpop.permute.xlu0 %958
  %960 = vrot.lane.b32.xlu0 %v250, 32
  %v961 = vpop.permute.xlu0 %960
  %vm962 = vcmp.lt.s32.totalorder %v342, 32
  %v963 = vsel %vm962, %v959, %v961
  %v964 = vsel %vm962, %v957, %v959
  %v965 = vsel %vm962, %v955, %v957
  %v966 = vsel %vm962, %v961, %v955
  %v967 = vsel %vm260, 1, 0
  %v968 = vperm.slane %v967, 0
  %v969 = vperm.slane %v967, 1
  %v970 = vperm.slane %v967, 2
  %v971 = vperm.slane %v967, 3
  %vm972 = vcmp.eq.s32.totalorder %v968, 1
  %vm973 = vcmp.eq.s32.totalorder %v969, 1
  %vm974 = vcmp.eq.s32.totalorder %v970, 1
  %vm975 = vcmp.eq.s32.totalorder %v971, 1
  %v976 = vsel %vm972, %v966, 0.0
  %v977 = vsel %vm973, %v965, 0.0
  %v978 = vsel %vm974, %v964, 0.0
  %v979 = vsel %vm975, %v963, 0.0
  %v980 = vperm.slane %v976, 0
  %v981 = vperm.slane %v977, 0
  %v982 = vperm.slane %v978, 0
  %v983 = vperm.slane %v979, 0
  %v984 = vmul.f32 %v425, %v980
  %v985 = vmul.f32 %v425, %v981
  %v986 = vmul.f32 %v425, %v982
  %v987 = vmul.f32 %v425, %v983
  %v988 = vadd.f32 %v950, %v984
  %v989 = vadd.f32 %v951, %v985
  %v990 = vadd.f32 %v952, %v986
  %v991 = vadd.f32 %v953, %v987
  %v992 = vperm.slane %v976, 1
  %v993 = vperm.slane %v977, 1
  %v994 = vperm.slane %v978, 1
  %v995 = vperm.slane %v979, 1
  %v996 = vmul.f32 %v442, %v992
  %v997 = vmul.f32 %v442, %v993
  %v998 = vmul.f32 %v442, %v994
  %v999 = vmul.f32 %v442, %v995
  %v1000 = vadd.f32 %v988, %v996
  %v1001 = vadd.f32 %v989, %v997
  %v1002 = vadd.f32 %v990, %v998
  %v1003 = vadd.f32 %v991, %v999
  %1004 = vrot.lane.b32.xlu0 %v247, 30
  %v1005 = vpop.permute.xlu0 %1004
  %1006 = vrot.lane.b32.xlu0 %v248, 30
  %v1007 = vpop.permute.xlu0 %1006
  %1008 = vrot.lane.b32.xlu0 %v249, 30
  %v1009 = vpop.permute.xlu0 %1008
  %1010 = vrot.lane.b32.xlu0 %v250, 30
  %v1011 = vpop.permute.xlu0 %1010
  %vm1012 = vcmp.lt.s32.totalorder %v342, 30
  %v1013 = vsel %vm1012, %v1009, %v1011
  %v1014 = vsel %vm1012, %v1007, %v1009
  %v1015 = vsel %vm1012, %v1005, %v1007
  %v1016 = vsel %vm1012, %v1011, %v1005
  %vm1017 = vmand %vm260, %vm266
  %v1018 = vsel %vm1017, 1, 0
  %v1019 = vperm.slane %v1018, 0
  %v1020 = vperm.slane %v1018, 1
  %v1021 = vperm.slane %v1018, 2
  %v1022 = vperm.slane %v1018, 3
  %vm1023 = vcmp.eq.s32.totalorder %v1019, 1
  %vm1024 = vcmp.eq.s32.totalorder %v1020, 1
  %vm1025 = vcmp.eq.s32.totalorder %v1021, 1
  %vm1026 = vcmp.eq.s32.totalorder %v1022, 1
  %v1027 = vsel %vm1023, %v1016, 0.0
  %v1028 = vsel %vm1024, %v1015, 0.0
  %v1029 = vsel %vm1025, %v1014, 0.0
  %v1030 = vsel %vm1026, %v1013, 0.0
  %v1031 = vperm.slane %v1027, 0
  %v1032 = vperm.slane %v1028, 0
  %v1033 = vperm.slane %v1029, 0
  %v1034 = vperm.slane %v1030, 0
  %v1035 = vmul.f32 %v486, %v1031
  %v1036 = vmul.f32 %v486, %v1032
  %v1037 = vmul.f32 %v486, %v1033
  %v1038 = vmul.f32 %v486, %v1034
  %v1039 = vadd.f32 %v1000, %v1035
  %v1040 = vadd.f32 %v1001, %v1036
  %v1041 = vadd.f32 %v1002, %v1037
  %v1042 = vadd.f32 %v1003, %v1038
  %v1043 = vperm.slane %v1027, 1
  %v1044 = vperm.slane %v1028, 1
  %v1045 = vperm.slane %v1029, 1
  %v1046 = vperm.slane %v1030, 1
  %v1047 = vmul.f32 %v503, %v1043
  %v1048 = vmul.f32 %v503, %v1044
  %v1049 = vmul.f32 %v503, %v1045
  %v1050 = vmul.f32 %v503, %v1046
  %v1051 = vadd.f32 %v1039, %v1047
  %v1052 = vadd.f32 %v1040, %v1048
  %v1053 = vadd.f32 %v1041, %v1049
  %v1054 = vadd.f32 %v1042, %v1050
  %1055 = vrot.lane.b32.xlu0 %v247, 2
  %v1056 = vpop.permute.xlu0 %1055
  %1057 = vrot.lane.b32.xlu0 %v248, 2
  %v1058 = vpop.permute.xlu0 %1057
  %1059 = vrot.lane.b32.xlu0 %v249, 2
  %v1060 = vpop.permute.xlu0 %1059
  %1061 = vrot.lane.b32.xlu0 %v250, 2
  %v1062 = vpop.permute.xlu0 %1061
  %vm1063 = vcmp.lt.s32.totalorder %v342, 2
  %v1064 = vsel %vm1063, %v1060, %v1062
  %v1065 = vsel %vm1063, %v1058, %v1060
  %v1066 = vsel %vm1063, %v1056, %v1058
  %v1067 = vsel %vm1063, %v1062, %v1056
  %v1068 = vsel %vm264, 1, 0
  %v1069 = vperm.slane %v1068, 0
  %v1070 = vperm.slane %v1068, 1
  %v1071 = vperm.slane %v1068, 2
  %v1072 = vperm.slane %v1068, 3
  %vm1073 = vcmp.eq.s32.totalorder %v1069, 1
  %vm1074 = vcmp.eq.s32.totalorder %v1070, 1
  %vm1075 = vcmp.eq.s32.totalorder %v1071, 1
  %vm1076 = vcmp.eq.s32.totalorder %v1072, 1
  %v1077 = vsel %vm1073, %v1067, 0.0
  %v1078 = vsel %vm1074, %v1066, 0.0
  %v1079 = vsel %vm1075, %v1065, 0.0
  %v1080 = vsel %vm1076, %v1064, 0.0
  %v1081 = vperm.slane %v1077, 0
  %v1082 = vperm.slane %v1078, 0
  %v1083 = vperm.slane %v1079, 0
  %v1084 = vperm.slane %v1080, 0
  %v1085 = vmul.f32 %v546, %v1081
  %v1086 = vmul.f32 %v546, %v1082
  %v1087 = vmul.f32 %v546, %v1083
  %v1088 = vmul.f32 %v546, %v1084
  %v1089 = vadd.f32 %v1051, %v1085
  %v1090 = vadd.f32 %v1052, %v1086
  %v1091 = vadd.f32 %v1053, %v1087
  %v1092 = vadd.f32 %v1054, %v1088
  %v1093 = vperm.slane %v1077, 1
  %v1094 = vperm.slane %v1078, 1
  %v1095 = vperm.slane %v1079, 1
  %v1096 = vperm.slane %v1080, 1
  %v1097 = vmul.f32 %v563, %v1093
  %v1098 = vmul.f32 %v563, %v1094
  %v1099 = vmul.f32 %v563, %v1095
  %v1100 = vmul.f32 %v563, %v1096
  %v1101 = vadd.f32 %v1089, %v1097
  %v1102 = vadd.f32 %v1090, %v1098
  %v1103 = vadd.f32 %v1091, %v1099
  %v1104 = vadd.f32 %v1092, %v1100
  %1105 = vrot.lane.b32.xlu0 %v247, 126
  %v1106 = vpop.permute.xlu0 %1105
  %1107 = vrot.lane.b32.xlu0 %v248, 126
  %v1108 = vpop.permute.xlu0 %1107
  %1109 = vrot.lane.b32.xlu0 %v249, 126
  %v1110 = vpop.permute.xlu0 %1109
  %1111 = vrot.lane.b32.xlu0 %v250, 126
  %v1112 = vpop.permute.xlu0 %1111
  %vm1113 = vcmp.lt.s32.totalorder %v342, 126
  %v1114 = vsel %vm1113, %v1110, %v1112
  %v1115 = vsel %vm1113, %v1108, %v1110
  %v1116 = vsel %vm1113, %v1106, %v1108
  %v1117 = vsel %vm1113, %v1112, %v1106
  %v1118 = vsel %vm266, 1, 0
  %v1119 = vperm.slane %v1118, 0
  %v1120 = vperm.slane %v1118, 1
  %v1121 = vperm.slane %v1118, 2
  %v1122 = vperm.slane %v1118, 3
  %vm1123 = vcmp.eq.s32.totalorder %v1119, 1
  %vm1124 = vcmp.eq.s32.totalorder %v1120, 1
  %vm1125 = vcmp.eq.s32.totalorder %v1121, 1
  %vm1126 = vcmp.eq.s32.totalorder %v1122, 1
  %v1127 = vsel %vm1123, %v1116, 0.0
  %v1128 = vsel %vm1124, %v1115, 0.0
  %v1129 = vsel %vm1125, %v1114, 0.0
  %v1130 = vsel %vm1126, %v1117, 0.0
  %v1131 = vperm.slane %v1127, 0
  %v1132 = vperm.slane %v1128, 0
  %v1133 = vperm.slane %v1129, 0
  %v1134 = vperm.slane %v1130, 0
  %v1135 = vmul.f32 %v606, %v1131
  %v1136 = vmul.f32 %v606, %v1132
  %v1137 = vmul.f32 %v606, %v1133
  %v1138 = vmul.f32 %v606, %v1134
  %v1139 = vadd.f32 %v1101, %v1135
  %v1140 = vadd.f32 %v1102, %v1136
  %v1141 = vadd.f32 %v1103, %v1137
  %v1142 = vadd.f32 %v1104, %v1138
  %v1143 = vperm.slane %v1127, 1
  %v1144 = vperm.slane %v1128, 1
  %v1145 = vperm.slane %v1129, 1
  %v1146 = vperm.slane %v1130, 1
  %v1147 = vmul.f32 %v623, %v1143
  %v1148 = vmul.f32 %v623, %v1144
  %v1149 = vmul.f32 %v623, %v1145
  %v1150 = vmul.f32 %v623, %v1146
  %v1151 = vadd.f32 %v1139, %v1147
  %v1152 = vadd.f32 %v1140, %v1148
  %v1153 = vadd.f32 %v1141, %v1149
  %v1154 = vadd.f32 %v1142, %v1150
  %1155 = vrot.lane.b32.xlu0 %v247, 98
  %v1156 = vpop.permute.xlu0 %1155
  %1157 = vrot.lane.b32.xlu0 %v248, 98
  %v1158 = vpop.permute.xlu0 %1157
  %1159 = vrot.lane.b32.xlu0 %v249, 98
  %v1160 = vpop.permute.xlu0 %1159
  %1161 = vrot.lane.b32.xlu0 %v250, 98
  %v1162 = vpop.permute.xlu0 %1161
  %vm1163 = vcmp.lt.s32.totalorder %v342, 98
  %v1164 = vsel %vm1163, %v1160, %v1162
  %v1165 = vsel %vm1163, %v1158, %v1160
  %v1166 = vsel %vm1163, %v1156, %v1158
  %v1167 = vsel %vm1163, %v1162, %v1156
  %vm1168 = vmand %vm262, %vm264
  %v1169 = vsel %vm1168, 1, 0
  %v1170 = vperm.slane %v1169, 0
  %v1171 = vperm.slane %v1169, 1
  %v1172 = vperm.slane %v1169, 2
  %v1173 = vperm.slane %v1169, 3
  %vm1174 = vcmp.eq.s32.totalorder %v1170, 1
  %vm1175 = vcmp.eq.s32.totalorder %v1171, 1
  %vm1176 = vcmp.eq.s32.totalorder %v1172, 1
  %vm1177 = vcmp.eq.s32.totalorder %v1173, 1
  %v1178 = vsel %vm1174, %v1166, 0.0
  %v1179 = vsel %vm1175, %v1165, 0.0
  %v1180 = vsel %vm1176, %v1164, 0.0
  %v1181 = vsel %vm1177, %v1167, 0.0
  %v1182 = vperm.slane %v1178, 0
  %v1183 = vperm.slane %v1179, 0
  %v1184 = vperm.slane %v1180, 0
  %v1185 = vperm.slane %v1181, 0
  %v1186 = vmul.f32 %v667, %v1182
  %v1187 = vmul.f32 %v667, %v1183
  %v1188 = vmul.f32 %v667, %v1184
  %v1189 = vmul.f32 %v667, %v1185
  %v1190 = vadd.f32 %v1151, %v1186
  %v1191 = vadd.f32 %v1152, %v1187
  %v1192 = vadd.f32 %v1153, %v1188
  %v1193 = vadd.f32 %v1154, %v1189
  %v1194 = vperm.slane %v1178, 1
  %v1195 = vperm.slane %v1179, 1
  %v1196 = vperm.slane %v1180, 1
  %v1197 = vperm.slane %v1181, 1
  %v1198 = vmul.f32 %v684, %v1194
  %v1199 = vmul.f32 %v684, %v1195
  %v1200 = vmul.f32 %v684, %v1196
  %v1201 = vmul.f32 %v684, %v1197
  %v1202 = vadd.f32 %v1190, %v1198
  %v1203 = vadd.f32 %v1191, %v1199
  %v1204 = vadd.f32 %v1192, %v1200
  %v1205 = vadd.f32 %v1193, %v1201
  %1206 = vrot.lane.b32.xlu0 %v247, 96
  %v1207 = vpop.permute.xlu0 %1206
  %1208 = vrot.lane.b32.xlu0 %v248, 96
  %v1209 = vpop.permute.xlu0 %1208
  %1210 = vrot.lane.b32.xlu0 %v249, 96
  %v1211 = vpop.permute.xlu0 %1210
  %1212 = vrot.lane.b32.xlu0 %v250, 96
  %v1213 = vpop.permute.xlu0 %1212
  %vm1214 = vcmp.lt.s32.totalorder %v342, 96
  %v1215 = vsel %vm1214, %v1211, %v1213
  %v1216 = vsel %vm1214, %v1209, %v1211
  %v1217 = vsel %vm1214, %v1207, %v1209
  %v1218 = vsel %vm1214, %v1213, %v1207
  %v1219 = vsel %vm262, 1, 0
  %v1220 = vperm.slane %v1219, 0
  %v1221 = vperm.slane %v1219, 1
  %v1222 = vperm.slane %v1219, 2
  %v1223 = vperm.slane %v1219, 3
  %vm1224 = vcmp.eq.s32.totalorder %v1220, 1
  %vm1225 = vcmp.eq.s32.totalorder %v1221, 1
  %vm1226 = vcmp.eq.s32.totalorder %v1222, 1
  %vm1227 = vcmp.eq.s32.totalorder %v1223, 1
  %v1228 = vsel %vm1224, %v1217, 0.0
  %v1229 = vsel %vm1225, %v1216, 0.0
  %v1230 = vsel %vm1226, %v1215, 0.0
  %v1231 = vsel %vm1227, %v1218, 0.0
  %v1232 = vperm.slane %v1228, 0
  %v1233 = vperm.slane %v1229, 0
  %v1234 = vperm.slane %v1230, 0
  %v1235 = vperm.slane %v1231, 0
  %v1236 = vmul.f32 %v727, %v1232
  %v1237 = vmul.f32 %v727, %v1233
  %v1238 = vmul.f32 %v727, %v1234
  %v1239 = vmul.f32 %v727, %v1235
  %v1240 = vadd.f32 %v1202, %v1236
  %v1241 = vadd.f32 %v1203, %v1237
  %v1242 = vadd.f32 %v1204, %v1238
  %v1243 = vadd.f32 %v1205, %v1239
  %v1244 = vperm.slane %v1228, 1
  %v1245 = vperm.slane %v1229, 1
  %v1246 = vperm.slane %v1230, 1
  %v1247 = vperm.slane %v1231, 1
  %v1248 = vmul.f32 %v744, %v1244
  %v1249 = vmul.f32 %v744, %v1245
  %v1250 = vmul.f32 %v744, %v1246
  %v1251 = vmul.f32 %v744, %v1247
  %v1252 = vadd.f32 %v1240, %v1248
  %v1253 = vadd.f32 %v1241, %v1249
  %v1254 = vadd.f32 %v1242, %v1250
  %v1255 = vadd.f32 %v1243, %v1251
  %1256 = vrot.lane.b32.xlu0 %v247, 94
  %v1257 = vpop.permute.xlu0 %1256
  %1258 = vrot.lane.b32.xlu0 %v248, 94
  %v1259 = vpop.permute.xlu0 %1258
  %1260 = vrot.lane.b32.xlu0 %v249, 94
  %v1261 = vpop.permute.xlu0 %1260
  %1262 = vrot.lane.b32.xlu0 %v250, 94
  %v1263 = vpop.permute.xlu0 %1262
  %vm1264 = vcmp.lt.s32.totalorder %v342, 94
  %v1265 = vsel %vm1264, %v1261, %v1263
  %v1266 = vsel %vm1264, %v1259, %v1261
  %v1267 = vsel %vm1264, %v1257, %v1259
  %v1268 = vsel %vm1264, %v1263, %v1257
  %vm1269 = vmand %vm262, %vm266
  %v1270 = vsel %vm1269, 1, 0
  %v1271 = vperm.slane %v1270, 0
  %v1272 = vperm.slane %v1270, 1
  %v1273 = vperm.slane %v1270, 2
  %v1274 = vperm.slane %v1270, 3
  %vm1275 = vcmp.eq.s32.totalorder %v1271, 1
  %vm1276 = vcmp.eq.s32.totalorder %v1272, 1
  %vm1277 = vcmp.eq.s32.totalorder %v1273, 1
  %vm1278 = vcmp.eq.s32.totalorder %v1274, 1
  %v1279 = vsel %vm1275, %v1267, 0.0
  %v1280 = vsel %vm1276, %v1266, 0.0
  %v1281 = vsel %vm1277, %v1265, 0.0
  %v1282 = vsel %vm1278, %v1268, 0.0
  %v1283 = vperm.slane %v1279, 0
  %v1284 = vperm.slane %v1280, 0
  %v1285 = vperm.slane %v1281, 0
  %v1286 = vperm.slane %v1282, 0
  %v1287 = vmul.f32 %v788, %v1283
  %v1288 = vmul.f32 %v788, %v1284
  %v1289 = vmul.f32 %v788, %v1285
  %v1290 = vmul.f32 %v788, %v1286
  %v1291 = vadd.f32 %v1252, %v1287
  %v1292 = vadd.f32 %v1253, %v1288
  %v1293 = vadd.f32 %v1254, %v1289
  %v1294 = vadd.f32 %v1255, %v1290
  %v1295 = vperm.slane %v1279, 1
  %v1296 = vperm.slane %v1280, 1
  %v1297 = vperm.slane %v1281, 1
  %v1298 = vperm.slane %v1282, 1
  %v1299 = vmul.f32 %v805, %v1295
  %v1300 = vmul.f32 %v805, %v1296
  %v1301 = vmul.f32 %v805, %v1297
  %v1302 = vmul.f32 %v805, %v1298
  %v1303 = vadd.f32 %v1291, %v1299
  %v1304 = vadd.f32 %v1292, %v1300
  %v1305 = vadd.f32 %v1293, %v1301
  %v1306 = vadd.f32 %v1294, %v1302
  %v1307 = vxor.u32 %v1303, 2147483648
  %v1308 = vxor.u32 %v1304, 2147483648
  %v1309 = vxor.u32 %v1305, 2147483648
  %v1310 = vxor.u32 %v1306, 2147483648
  %v1311 = vmul.f32 %v1307, 1.442695
  %v1312 = vpow.pop %v1311
  %v1313 = vmul.f32 %v1308, 1.442695
  %v1314 = vpow.pop %v1313
  %v1315 = vmul.f32 %v1309, 1.442695
  %v1316 = vpow.pop %v1315
  %v1317 = vmul.f32 %v1310, 1.442695
  %v1318 = vpow.pop %v1317
  %v1319 = vadd.f32 %v1312, 1.0
  %v1320 = vadd.f32 %v1314, 1.0
  %v1321 = vadd.f32 %v1316, 1.0
  %v1322 = vadd.f32 %v1318, 1.0
  %v1323 = vrcp.pop %v1319
  %v1324 = vmul.f32 %v1319, %v1323
  %v1325 = vsub.f32 1.0, %v1324
  %v1326 = vmul.f32 %v1323, %v1325
  %v1327 = vadd.f32 %v1323, %v1326
  %vm1328 = vweird.f32 %v1319
  %vm1329 = vweird.f32 %v1323
  %vm1330 = vmor %vm1328, %vm1329
  %v1331 = vsel %vm1330, %v1323, %v1327
  %v1332 = vand.u32 2147483647, %v1319
  %vm1333 = vcmp.eq.f32.partialorder %v1332, 8.507059e+37
  %v1334 = vand.u32 %v1319, 2147483648
  %v1335 = vor.u32 1.1754944e-38, %v1334
  %v1336 = vsel %vm1333, %v1335, %v1331
  %v1337 = vmul.f32 1.0, %v1336
  %v1338 = vrcp.pop %v1320
  %v1339 = vmul.f32 %v1320, %v1338
  %v1340 = vsub.f32 1.0, %v1339
  %v1341 = vmul.f32 %v1338, %v1340
  %v1342 = vadd.f32 %v1338, %v1341
  %vm1343 = vweird.f32 %v1320
  %vm1344 = vweird.f32 %v1338
  %vm1345 = vmor %vm1343, %vm1344
  %v1346 = vsel %vm1345, %v1338, %v1342
  %v1347 = vand.u32 2147483647, %v1320
  %vm1348 = vcmp.eq.f32.partialorder %v1347, 8.507059e+37
  %v1349 = vand.u32 %v1320, 2147483648
  %v1350 = vor.u32 1.1754944e-38, %v1349
  %v1351 = vsel %vm1348, %v1350, %v1346
  %v1352 = vmul.f32 1.0, %v1351
  %v1353 = vrcp.pop %v1321
  %v1354 = vmul.f32 %v1321, %v1353
  %v1355 = vsub.f32 1.0, %v1354
  %v1356 = vmul.f32 %v1353, %v1355
  %v1357 = vadd.f32 %v1353, %v1356
  %vm1358 = vweird.f32 %v1321
  %vm1359 = vweird.f32 %v1353
  %vm1360 = vmor %vm1358, %vm1359
  %v1361 = vsel %vm1360, %v1353, %v1357
  %v1362 = vand.u32 2147483647, %v1321
  %vm1363 = vcmp.eq.f32.partialorder %v1362, 8.507059e+37
  %v1364 = vand.u32 %v1321, 2147483648
  %v1365 = vor.u32 1.1754944e-38, %v1364
  %v1366 = vsel %vm1363, %v1365, %v1361
  %v1367 = vmul.f32 1.0, %v1366
  %v1368 = vrcp.pop %v1322
  %v1369 = vmul.f32 %v1322, %v1368
  %v1370 = vsub.f32 1.0, %v1369
  %v1371 = vmul.f32 %v1368, %v1370
  %v1372 = vadd.f32 %v1368, %v1371
  %vm1373 = vweird.f32 %v1322
  %vm1374 = vweird.f32 %v1368
  %vm1375 = vmor %vm1373, %vm1374
  %v1376 = vsel %vm1375, %v1368, %v1372
  %v1377 = vand.u32 2147483647, %v1322
  %vm1378 = vcmp.eq.f32.partialorder %v1377, 8.507059e+37
  %v1379 = vand.u32 %v1322, 2147483648
  %v1380 = vor.u32 1.1754944e-38, %v1379
  %v1381 = vsel %vm1378, %v1380, %v1376
  %v1382 = vmul.f32 1.0, %v1381
  %v1383 = vmul.f32 %v1303, %v1337
  %v1384 = vmul.f32 %v1304, %v1352
  %v1385 = vmul.f32 %v1305, %v1367
  %v1386 = vmul.f32 %v1306, %v1382
  %v1387 = vadd.f32 %v899, %v1383
  %v1388 = vadd.f32 %v900, %v1384
  %v1389 = vadd.f32 %v901, %v1385
  %v1390 = vadd.f32 %v902, %v1386
  %1391 = vrot.lane.b32.xlu0 %v247, 51
  %v1392 = vpop.permute.xlu0 %1391
  %1393 = vrot.lane.b32.xlu0 %v248, 51
  %v1394 = vpop.permute.xlu0 %1393
  %1395 = vrot.lane.b32.xlu0 %v249, 51
  %v1396 = vpop.permute.xlu0 %1395
  %1397 = vrot.lane.b32.xlu0 %v250, 51
  %v1398 = vpop.permute.xlu0 %1397
  %vm1399 = vcmp.lt.s32.totalorder %v342, 51
  %v1400 = vsel %vm1399, %v1396, %v1398
  %v1401 = vsel %vm1399, %v1394, %v1396
  %v1402 = vsel %vm1399, %v1392, %v1394
  %v1403 = vsel %vm1399, %v1398, %v1392
  %vm1404 = vmand %vm268, %vm272
  %v1405 = vsel %vm1404, 1, 0
  %v1406 = vperm.slane %v1405, 0
  %v1407 = vperm.slane %v1405, 1
  %v1408 = vperm.slane %v1405, 2
  %v1409 = vperm.slane %v1405, 3
  %vm1410 = vcmp.eq.s32.totalorder %v1406, 1
  %vm1411 = vcmp.eq.s32.totalorder %v1407, 1
  %vm1412 = vcmp.eq.s32.totalorder %v1408, 1
  %vm1413 = vcmp.eq.s32.totalorder %v1409, 1
  %v1414 = vsel %vm1410, %v1403, 0.0
  %v1415 = vsel %vm1411, %v1402, 0.0
  %v1416 = vsel %vm1412, %v1401, 0.0
  %v1417 = vsel %vm1413, %v1400, 0.0
  %v1418 = vperm.slane %v1414, 0
  %v1419 = vperm.slane %v1415, 0
  %v1420 = vperm.slane %v1416, 0
  %v1421 = vperm.slane %v1417, 0
  %v1422 = vmul.f32 %v365, %v1418
  %v1423 = vmul.f32 %v365, %v1419
  %v1424 = vmul.f32 %v365, %v1420
  %v1425 = vmul.f32 %v365, %v1421
  %v1426 = vadd.f32 %v329, %v1422
  %v1427 = vadd.f32 %v330, %v1423
  %v1428 = vadd.f32 %v331, %v1424
  %v1429 = vadd.f32 %v332, %v1425
  %v1430 = vperm.slane %v1414, 1
  %v1431 = vperm.slane %v1415, 1
  %v1432 = vperm.slane %v1416, 1
  %v1433 = vperm.slane %v1417, 1
  %v1434 = vmul.f32 %v382, %v1430
  %v1435 = vmul.f32 %v382, %v1431
  %v1436 = vmul.f32 %v382, %v1432
  %v1437 = vmul.f32 %v382, %v1433
  %v1438 = vadd.f32 %v1426, %v1434
  %v1439 = vadd.f32 %v1427, %v1435
  %v1440 = vadd.f32 %v1428, %v1436
  %v1441 = vadd.f32 %v1429, %v1437
  %1442 = vrot.lane.b32.xlu0 %v247, 48
  %v1443 = vpop.permute.xlu0 %1442
  %1444 = vrot.lane.b32.xlu0 %v248, 48
  %v1445 = vpop.permute.xlu0 %1444
  %1446 = vrot.lane.b32.xlu0 %v249, 48
  %v1447 = vpop.permute.xlu0 %1446
  %1448 = vrot.lane.b32.xlu0 %v250, 48
  %v1449 = vpop.permute.xlu0 %1448
  %vm1450 = vcmp.lt.s32.totalorder %v342, 48
  %v1451 = vsel %vm1450, %v1447, %v1449
  %v1452 = vsel %vm1450, %v1445, %v1447
  %v1453 = vsel %vm1450, %v1443, %v1445
  %v1454 = vsel %vm1450, %v1449, %v1443
  %v1455 = vsel %vm268, 1, 0
  %v1456 = vperm.slane %v1455, 0
  %v1457 = vperm.slane %v1455, 1
  %v1458 = vperm.slane %v1455, 2
  %v1459 = vperm.slane %v1455, 3
  %vm1460 = vcmp.eq.s32.totalorder %v1456, 1
  %vm1461 = vcmp.eq.s32.totalorder %v1457, 1
  %vm1462 = vcmp.eq.s32.totalorder %v1458, 1
  %vm1463 = vcmp.eq.s32.totalorder %v1459, 1
  %v1464 = vsel %vm1460, %v1454, 0.0
  %v1465 = vsel %vm1461, %v1453, 0.0
  %v1466 = vsel %vm1462, %v1452, 0.0
  %v1467 = vsel %vm1463, %v1451, 0.0
  %v1468 = vperm.slane %v1464, 0
  %v1469 = vperm.slane %v1465, 0
  %v1470 = vperm.slane %v1466, 0
  %v1471 = vperm.slane %v1467, 0
  %v1472 = vmul.f32 %v425, %v1468
  %v1473 = vmul.f32 %v425, %v1469
  %v1474 = vmul.f32 %v425, %v1470
  %v1475 = vmul.f32 %v425, %v1471
  %v1476 = vadd.f32 %v1438, %v1472
  %v1477 = vadd.f32 %v1439, %v1473
  %v1478 = vadd.f32 %v1440, %v1474
  %v1479 = vadd.f32 %v1441, %v1475
  %v1480 = vperm.slane %v1464, 1
  %v1481 = vperm.slane %v1465, 1
  %v1482 = vperm.slane %v1466, 1
  %v1483 = vperm.slane %v1467, 1
  %v1484 = vmul.f32 %v442, %v1480
  %v1485 = vmul.f32 %v442, %v1481
  %v1486 = vmul.f32 %v442, %v1482
  %v1487 = vmul.f32 %v442, %v1483
  %v1488 = vadd.f32 %v1476, %v1484
  %v1489 = vadd.f32 %v1477, %v1485
  %v1490 = vadd.f32 %v1478, %v1486
  %v1491 = vadd.f32 %v1479, %v1487
  %1492 = vrot.lane.b32.xlu0 %v247, 45
  %v1493 = vpop.permute.xlu0 %1492
  %1494 = vrot.lane.b32.xlu0 %v248, 45
  %v1495 = vpop.permute.xlu0 %1494
  %1496 = vrot.lane.b32.xlu0 %v249, 45
  %v1497 = vpop.permute.xlu0 %1496
  %1498 = vrot.lane.b32.xlu0 %v250, 45
  %v1499 = vpop.permute.xlu0 %1498
  %vm1500 = vcmp.lt.s32.totalorder %v342, 45
  %v1501 = vsel %vm1500, %v1497, %v1499
  %v1502 = vsel %vm1500, %v1495, %v1497
  %v1503 = vsel %vm1500, %v1493, %v1495
  %v1504 = vsel %vm1500, %v1499, %v1493
  %vm1505 = vmand %vm268, %vm274
  %v1506 = vsel %vm1505, 1, 0
  %v1507 = vperm.slane %v1506, 0
  %v1508 = vperm.slane %v1506, 1
  %v1509 = vperm.slane %v1506, 2
  %v1510 = vperm.slane %v1506, 3
  %vm1511 = vcmp.eq.s32.totalorder %v1507, 1
  %vm1512 = vcmp.eq.s32.totalorder %v1508, 1
  %vm1513 = vcmp.eq.s32.totalorder %v1509, 1
  %vm1514 = vcmp.eq.s32.totalorder %v1510, 1
  %v1515 = vsel %vm1511, %v1504, 0.0
  %v1516 = vsel %vm1512, %v1503, 0.0
  %v1517 = vsel %vm1513, %v1502, 0.0
  %v1518 = vsel %vm1514, %v1501, 0.0
  %v1519 = vperm.slane %v1515, 0
  %v1520 = vperm.slane %v1516, 0
  %v1521 = vperm.slane %v1517, 0
  %v1522 = vperm.slane %v1518, 0
  %v1523 = vmul.f32 %v486, %v1519
  %v1524 = vmul.f32 %v486, %v1520
  %v1525 = vmul.f32 %v486, %v1521
  %v1526 = vmul.f32 %v486, %v1522
  %v1527 = vadd.f32 %v1488, %v1523
  %v1528 = vadd.f32 %v1489, %v1524
  %v1529 = vadd.f32 %v1490, %v1525
  %v1530 = vadd.f32 %v1491, %v1526
  %v1531 = vperm.slane %v1515, 1
  %v1532 = vperm.slane %v1516, 1
  %v1533 = vperm.slane %v1517, 1
  %v1534 = vperm.slane %v1518, 1
  %v1535 = vmul.f32 %v503, %v1531
  %v1536 = vmul.f32 %v503, %v1532
  %v1537 = vmul.f32 %v503, %v1533
  %v1538 = vmul.f32 %v503, %v1534
  %v1539 = vadd.f32 %v1527, %v1535
  %v1540 = vadd.f32 %v1528, %v1536
  %v1541 = vadd.f32 %v1529, %v1537
  %v1542 = vadd.f32 %v1530, %v1538
  %1543 = vrot.lane.b32.xlu0 %v247, 3
  %v1544 = vpop.permute.xlu0 %1543
  %1545 = vrot.lane.b32.xlu0 %v248, 3
  %v1546 = vpop.permute.xlu0 %1545
  %1547 = vrot.lane.b32.xlu0 %v249, 3
  %v1548 = vpop.permute.xlu0 %1547
  %1549 = vrot.lane.b32.xlu0 %v250, 3
  %v1550 = vpop.permute.xlu0 %1549
  %vm1551 = vcmp.lt.s32.totalorder %v342, 3
  %v1552 = vsel %vm1551, %v1548, %v1550
  %v1553 = vsel %vm1551, %v1546, %v1548
  %v1554 = vsel %vm1551, %v1544, %v1546
  %v1555 = vsel %vm1551, %v1550, %v1544
  %v1556 = vsel %vm272, 1, 0
  %v1557 = vperm.slane %v1556, 0
  %v1558 = vperm.slane %v1556, 1
  %v1559 = vperm.slane %v1556, 2
  %v1560 = vperm.slane %v1556, 3
  %vm1561 = vcmp.eq.s32.totalorder %v1557, 1
  %vm1562 = vcmp.eq.s32.totalorder %v1558, 1
  %vm1563 = vcmp.eq.s32.totalorder %v1559, 1
  %vm1564 = vcmp.eq.s32.totalorder %v1560, 1
  %v1565 = vsel %vm1561, %v1555, 0.0
  %v1566 = vsel %vm1562, %v1554, 0.0
  %v1567 = vsel %vm1563, %v1553, 0.0
  %v1568 = vsel %vm1564, %v1552, 0.0
  %v1569 = vperm.slane %v1565, 0
  %v1570 = vperm.slane %v1566, 0
  %v1571 = vperm.slane %v1567, 0
  %v1572 = vperm.slane %v1568, 0
  %v1573 = vmul.f32 %v546, %v1569
  %v1574 = vmul.f32 %v546, %v1570
  %v1575 = vmul.f32 %v546, %v1571
  %v1576 = vmul.f32 %v546, %v1572
  %v1577 = vadd.f32 %v1539, %v1573
  %v1578 = vadd.f32 %v1540, %v1574
  %v1579 = vadd.f32 %v1541, %v1575
  %v1580 = vadd.f32 %v1542, %v1576
  %v1581 = vperm.slane %v1565, 1
  %v1582 = vperm.slane %v1566, 1
  %v1583 = vperm.slane %v1567, 1
  %v1584 = vperm.slane %v1568, 1
  %v1585 = vmul.f32 %v563, %v1581
  %v1586 = vmul.f32 %v563, %v1582
  %v1587 = vmul.f32 %v563, %v1583
  %v1588 = vmul.f32 %v563, %v1584
  %v1589 = vadd.f32 %v1577, %v1585
  %v1590 = vadd.f32 %v1578, %v1586
  %v1591 = vadd.f32 %v1579, %v1587
  %v1592 = vadd.f32 %v1580, %v1588
  %1593 = vrot.lane.b32.xlu0 %v247, 125
  %v1594 = vpop.permute.xlu0 %1593
  %1595 = vrot.lane.b32.xlu0 %v248, 125
  %v1596 = vpop.permute.xlu0 %1595
  %1597 = vrot.lane.b32.xlu0 %v249, 125
  %v1598 = vpop.permute.xlu0 %1597
  %1599 = vrot.lane.b32.xlu0 %v250, 125
  %v1600 = vpop.permute.xlu0 %1599
  %vm1601 = vcmp.lt.s32.totalorder %v342, 125
  %v1602 = vsel %vm1601, %v1598, %v1600
  %v1603 = vsel %vm1601, %v1596, %v1598
  %v1604 = vsel %vm1601, %v1594, %v1596
  %v1605 = vsel %vm1601, %v1600, %v1594
  %v1606 = vsel %vm274, 1, 0
  %v1607 = vperm.slane %v1606, 0
  %v1608 = vperm.slane %v1606, 1
  %v1609 = vperm.slane %v1606, 2
  %v1610 = vperm.slane %v1606, 3
  %vm1611 = vcmp.eq.s32.totalorder %v1607, 1
  %vm1612 = vcmp.eq.s32.totalorder %v1608, 1
  %vm1613 = vcmp.eq.s32.totalorder %v1609, 1
  %vm1614 = vcmp.eq.s32.totalorder %v1610, 1
  %v1615 = vsel %vm1611, %v1604, 0.0
  %v1616 = vsel %vm1612, %v1603, 0.0
  %v1617 = vsel %vm1613, %v1602, 0.0
  %v1618 = vsel %vm1614, %v1605, 0.0
  %v1619 = vperm.slane %v1615, 0
  %v1620 = vperm.slane %v1616, 0
  %v1621 = vperm.slane %v1617, 0
  %v1622 = vperm.slane %v1618, 0
  %v1623 = vmul.f32 %v606, %v1619
  %v1624 = vmul.f32 %v606, %v1620
  %v1625 = vmul.f32 %v606, %v1621
  %v1626 = vmul.f32 %v606, %v1622
  %v1627 = vadd.f32 %v1589, %v1623
  %v1628 = vadd.f32 %v1590, %v1624
  %v1629 = vadd.f32 %v1591, %v1625
  %v1630 = vadd.f32 %v1592, %v1626
  %v1631 = vperm.slane %v1615, 1
  %v1632 = vperm.slane %v1616, 1
  %v1633 = vperm.slane %v1617, 1
  %v1634 = vperm.slane %v1618, 1
  %v1635 = vmul.f32 %v623, %v1631
  %v1636 = vmul.f32 %v623, %v1632
  %v1637 = vmul.f32 %v623, %v1633
  %v1638 = vmul.f32 %v623, %v1634
  %v1639 = vadd.f32 %v1627, %v1635
  %v1640 = vadd.f32 %v1628, %v1636
  %v1641 = vadd.f32 %v1629, %v1637
  %v1642 = vadd.f32 %v1630, %v1638
  %1643 = vrot.lane.b32.xlu0 %v247, 83
  %v1644 = vpop.permute.xlu0 %1643
  %1645 = vrot.lane.b32.xlu0 %v248, 83
  %v1646 = vpop.permute.xlu0 %1645
  %1647 = vrot.lane.b32.xlu0 %v249, 83
  %v1648 = vpop.permute.xlu0 %1647
  %1649 = vrot.lane.b32.xlu0 %v250, 83
  %v1650 = vpop.permute.xlu0 %1649
  %vm1651 = vcmp.lt.s32.totalorder %v342, 83
  %v1652 = vsel %vm1651, %v1648, %v1650
  %v1653 = vsel %vm1651, %v1646, %v1648
  %v1654 = vsel %vm1651, %v1644, %v1646
  %v1655 = vsel %vm1651, %v1650, %v1644
  %vm1656 = vmand %vm270, %vm272
  %v1657 = vsel %vm1656, 1, 0
  %v1658 = vperm.slane %v1657, 0
  %v1659 = vperm.slane %v1657, 1
  %v1660 = vperm.slane %v1657, 2
  %v1661 = vperm.slane %v1657, 3
  %vm1662 = vcmp.eq.s32.totalorder %v1658, 1
  %vm1663 = vcmp.eq.s32.totalorder %v1659, 1
  %vm1664 = vcmp.eq.s32.totalorder %v1660, 1
  %vm1665 = vcmp.eq.s32.totalorder %v1661, 1
  %v1666 = vsel %vm1662, %v1654, 0.0
  %v1667 = vsel %vm1663, %v1653, 0.0
  %v1668 = vsel %vm1664, %v1652, 0.0
  %v1669 = vsel %vm1665, %v1655, 0.0
  %v1670 = vperm.slane %v1666, 0
  %v1671 = vperm.slane %v1667, 0
  %v1672 = vperm.slane %v1668, 0
  %v1673 = vperm.slane %v1669, 0
  %v1674 = vmul.f32 %v667, %v1670
  %v1675 = vmul.f32 %v667, %v1671
  %v1676 = vmul.f32 %v667, %v1672
  %v1677 = vmul.f32 %v667, %v1673
  %v1678 = vadd.f32 %v1639, %v1674
  %v1679 = vadd.f32 %v1640, %v1675
  %v1680 = vadd.f32 %v1641, %v1676
  %v1681 = vadd.f32 %v1642, %v1677
  %v1682 = vperm.slane %v1666, 1
  %v1683 = vperm.slane %v1667, 1
  %v1684 = vperm.slane %v1668, 1
  %v1685 = vperm.slane %v1669, 1
  %v1686 = vmul.f32 %v684, %v1682
  %v1687 = vmul.f32 %v684, %v1683
  %v1688 = vmul.f32 %v684, %v1684
  %v1689 = vmul.f32 %v684, %v1685
  %v1690 = vadd.f32 %v1678, %v1686
  %v1691 = vadd.f32 %v1679, %v1687
  %v1692 = vadd.f32 %v1680, %v1688
  %v1693 = vadd.f32 %v1681, %v1689
  %1694 = vrot.lane.b32.xlu0 %v247, 80
  %v1695 = vpop.permute.xlu0 %1694
  %1696 = vrot.lane.b32.xlu0 %v248, 80
  %v1697 = vpop.permute.xlu0 %1696
  %1698 = vrot.lane.b32.xlu0 %v249, 80
  %v1699 = vpop.permute.xlu0 %1698
  %1700 = vrot.lane.b32.xlu0 %v250, 80
  %v1701 = vpop.permute.xlu0 %1700
  %vm1702 = vcmp.lt.s32.totalorder %v342, 80
  %v1703 = vsel %vm1702, %v1699, %v1701
  %v1704 = vsel %vm1702, %v1697, %v1699
  %v1705 = vsel %vm1702, %v1695, %v1697
  %v1706 = vsel %vm1702, %v1701, %v1695
  %v1707 = vsel %vm270, 1, 0
  %v1708 = vperm.slane %v1707, 0
  %v1709 = vperm.slane %v1707, 1
  %v1710 = vperm.slane %v1707, 2
  %v1711 = vperm.slane %v1707, 3
  %vm1712 = vcmp.eq.s32.totalorder %v1708, 1
  %vm1713 = vcmp.eq.s32.totalorder %v1709, 1
  %vm1714 = vcmp.eq.s32.totalorder %v1710, 1
  %vm1715 = vcmp.eq.s32.totalorder %v1711, 1
  %v1716 = vsel %vm1712, %v1705, 0.0
  %v1717 = vsel %vm1713, %v1704, 0.0
  %v1718 = vsel %vm1714, %v1703, 0.0
  %v1719 = vsel %vm1715, %v1706, 0.0
  %v1720 = vperm.slane %v1716, 0
  %v1721 = vperm.slane %v1717, 0
  %v1722 = vperm.slane %v1718, 0
  %v1723 = vperm.slane %v1719, 0
  %v1724 = vmul.f32 %v727, %v1720
  %v1725 = vmul.f32 %v727, %v1721
  %v1726 = vmul.f32 %v727, %v1722
  %v1727 = vmul.f32 %v727, %v1723
  %v1728 = vadd.f32 %v1690, %v1724
  %v1729 = vadd.f32 %v1691, %v1725
  %v1730 = vadd.f32 %v1692, %v1726
  %v1731 = vadd.f32 %v1693, %v1727
  %v1732 = vperm.slane %v1716, 1
  %v1733 = vperm.slane %v1717, 1
  %v1734 = vperm.slane %v1718, 1
  %v1735 = vperm.slane %v1719, 1
  %v1736 = vmul.f32 %v744, %v1732
  %v1737 = vmul.f32 %v744, %v1733
  %v1738 = vmul.f32 %v744, %v1734
  %v1739 = vmul.f32 %v744, %v1735
  %v1740 = vadd.f32 %v1728, %v1736
  %v1741 = vadd.f32 %v1729, %v1737
  %v1742 = vadd.f32 %v1730, %v1738
  %v1743 = vadd.f32 %v1731, %v1739
  %1744 = vrot.lane.b32.xlu0 %v247, 77
  %v1745 = vpop.permute.xlu0 %1744
  %1746 = vrot.lane.b32.xlu0 %v248, 77
  %v1747 = vpop.permute.xlu0 %1746
  %1748 = vrot.lane.b32.xlu0 %v249, 77
  %v1749 = vpop.permute.xlu0 %1748
  %1750 = vrot.lane.b32.xlu0 %v250, 77
  %v1751 = vpop.permute.xlu0 %1750
  %vm1752 = vcmp.lt.s32.totalorder %v342, 77
  %v1753 = vsel %vm1752, %v1749, %v1751
  %v1754 = vsel %vm1752, %v1747, %v1749
  %v1755 = vsel %vm1752, %v1745, %v1747
  %v1756 = vsel %vm1752, %v1751, %v1745
  %vm1757 = vmand %vm270, %vm274
  %v1758 = vsel %vm1757, 1, 0
  %v1759 = vperm.slane %v1758, 0
  %v1760 = vperm.slane %v1758, 1
  %v1761 = vperm.slane %v1758, 2
  %v1762 = vperm.slane %v1758, 3
  %vm1763 = vcmp.eq.s32.totalorder %v1759, 1
  %vm1764 = vcmp.eq.s32.totalorder %v1760, 1
  %vm1765 = vcmp.eq.s32.totalorder %v1761, 1
  %vm1766 = vcmp.eq.s32.totalorder %v1762, 1
  %v1767 = vsel %vm1763, %v1755, 0.0
  %v1768 = vsel %vm1764, %v1754, 0.0
  %v1769 = vsel %vm1765, %v1753, 0.0
  %v1770 = vsel %vm1766, %v1756, 0.0
  %v1771 = vperm.slane %v1767, 0
  %v1772 = vperm.slane %v1768, 0
  %v1773 = vperm.slane %v1769, 0
  %v1774 = vperm.slane %v1770, 0
  %v1775 = vmul.f32 %v788, %v1771
  %v1776 = vmul.f32 %v788, %v1772
  %v1777 = vmul.f32 %v788, %v1773
  %v1778 = vmul.f32 %v788, %v1774
  %v1779 = vadd.f32 %v1740, %v1775
  %v1780 = vadd.f32 %v1741, %v1776
  %v1781 = vadd.f32 %v1742, %v1777
  %v1782 = vadd.f32 %v1743, %v1778
  %v1783 = vperm.slane %v1767, 1
  %v1784 = vperm.slane %v1768, 1
  %v1785 = vperm.slane %v1769, 1
  %v1786 = vperm.slane %v1770, 1
  %v1787 = vmul.f32 %v805, %v1783
  %v1788 = vmul.f32 %v805, %v1784
  %v1789 = vmul.f32 %v805, %v1785
  %v1790 = vmul.f32 %v805, %v1786
  %v1791 = vadd.f32 %v1779, %v1787
  %v1792 = vadd.f32 %v1780, %v1788
  %v1793 = vadd.f32 %v1781, %v1789
  %v1794 = vadd.f32 %v1782, %v1790
  %v1795 = vxor.u32 %v1791, 2147483648
  %v1796 = vxor.u32 %v1792, 2147483648
  %v1797 = vxor.u32 %v1793, 2147483648
  %v1798 = vxor.u32 %v1794, 2147483648
  %v1799 = vmul.f32 %v1795, 1.442695
  %v1800 = vpow.pop %v1799
  %v1801 = vmul.f32 %v1796, 1.442695
  %v1802 = vpow.pop %v1801
  %v1803 = vmul.f32 %v1797, 1.442695
  %v1804 = vpow.pop %v1803
  %v1805 = vmul.f32 %v1798, 1.442695
  %v1806 = vpow.pop %v1805
  %v1807 = vadd.f32 %v1800, 1.0
  %v1808 = vadd.f32 %v1802, 1.0
  %v1809 = vadd.f32 %v1804, 1.0
  %v1810 = vadd.f32 %v1806, 1.0
  %v1811 = vrcp.pop %v1807
  %v1812 = vmul.f32 %v1807, %v1811
  %v1813 = vsub.f32 1.0, %v1812
  %v1814 = vmul.f32 %v1811, %v1813
  %v1815 = vadd.f32 %v1811, %v1814
  %vm1816 = vweird.f32 %v1807
  %vm1817 = vweird.f32 %v1811
  %vm1818 = vmor %vm1816, %vm1817
  %v1819 = vsel %vm1818, %v1811, %v1815
  %v1820 = vand.u32 2147483647, %v1807
  %vm1821 = vcmp.eq.f32.partialorder %v1820, 8.507059e+37
  %v1822 = vand.u32 %v1807, 2147483648
  %v1823 = vor.u32 1.1754944e-38, %v1822
  %v1824 = vsel %vm1821, %v1823, %v1819
  %v1825 = vmul.f32 1.0, %v1824
  %v1826 = vrcp.pop %v1808
  %v1827 = vmul.f32 %v1808, %v1826
  %v1828 = vsub.f32 1.0, %v1827
  %v1829 = vmul.f32 %v1826, %v1828
  %v1830 = vadd.f32 %v1826, %v1829
  %vm1831 = vweird.f32 %v1808
  %vm1832 = vweird.f32 %v1826
  %vm1833 = vmor %vm1831, %vm1832
  %v1834 = vsel %vm1833, %v1826, %v1830
  %v1835 = vand.u32 2147483647, %v1808
  %vm1836 = vcmp.eq.f32.partialorder %v1835, 8.507059e+37
  %v1837 = vand.u32 %v1808, 2147483648
  %v1838 = vor.u32 1.1754944e-38, %v1837
  %v1839 = vsel %vm1836, %v1838, %v1834
  %v1840 = vmul.f32 1.0, %v1839
  %v1841 = vrcp.pop %v1809
  %v1842 = vmul.f32 %v1809, %v1841
  %v1843 = vsub.f32 1.0, %v1842
  %v1844 = vmul.f32 %v1841, %v1843
  %v1845 = vadd.f32 %v1841, %v1844
  %vm1846 = vweird.f32 %v1809
  %vm1847 = vweird.f32 %v1841
  %vm1848 = vmor %vm1846, %vm1847
  %v1849 = vsel %vm1848, %v1841, %v1845
  %v1850 = vand.u32 2147483647, %v1809
  %vm1851 = vcmp.eq.f32.partialorder %v1850, 8.507059e+37
  %v1852 = vand.u32 %v1809, 2147483648
  %v1853 = vor.u32 1.1754944e-38, %v1852
  %v1854 = vsel %vm1851, %v1853, %v1849
  %v1855 = vmul.f32 1.0, %v1854
  %v1856 = vrcp.pop %v1810
  %v1857 = vmul.f32 %v1810, %v1856
  %v1858 = vsub.f32 1.0, %v1857
  %v1859 = vmul.f32 %v1856, %v1858
  %v1860 = vadd.f32 %v1856, %v1859
  %vm1861 = vweird.f32 %v1810
  %vm1862 = vweird.f32 %v1856
  %vm1863 = vmor %vm1861, %vm1862
  %v1864 = vsel %vm1863, %v1856, %v1860
  %v1865 = vand.u32 2147483647, %v1810
  %vm1866 = vcmp.eq.f32.partialorder %v1865, 8.507059e+37
  %v1867 = vand.u32 %v1810, 2147483648
  %v1868 = vor.u32 1.1754944e-38, %v1867
  %v1869 = vsel %vm1866, %v1868, %v1864
  %v1870 = vmul.f32 1.0, %v1869
  %v1871 = vmul.f32 %v1791, %v1825
  %v1872 = vmul.f32 %v1792, %v1840
  %v1873 = vmul.f32 %v1793, %v1855
  %v1874 = vmul.f32 %v1794, %v1870
  %v1875 = vadd.f32 %v1387, %v1871
  %v1876 = vadd.f32 %v1388, %v1872
  %v1877 = vadd.f32 %v1389, %v1873
  %v1878 = vadd.f32 %v1390, %v1874
  %1879 = vst [vmem:[#allocation1] ss:$2 sm:$0xff] %v32
  %s1880 = scalar_lea.vmem [#allocation1], 16
  %1881 = vst [vmem:[%s1880] ss:$2 sm:$0xff] %v33
  %v1882 = vld.sshfl [vmem:[#allocation1] sm:$0xff pattern:$0x75316420]
  %v1883 = vld.sshfl [vmem:[#allocation1 + $0x8] sm:$0xff pattern:$0x75316420]
  %v1884 = vld.sshfl [vmem:[#allocation1 + $0x10] sm:$0xff pattern:$0x75316420]
  %v1885 = vld.sshfl [vmem:[#allocation1 + $0x18] sm:$0xff pattern:$0x75316420]
  %v1890 = vadd.f32 %v1875, %v1882
  %v1891 = vadd.f32 %v1876, %v1883
  %v1892 = vadd.f32 %v1877, %v1884
  %v1893 = vadd.f32 %v1878, %v1885
  %v1894 = vld [vmem:[%s7] sm:$0xf]
  %1896 = vset.pattern.permute.xlu0 0
  %1897 = vperm.xlu0 %1896, %v1894
  %v1898 = vpop.permute.xlu0 %1897
  %v1900 = vmul.f32 %v1890, %v1898
  %v1901 = vmul.f32 %v1891, %v1898
  %v1902 = vmul.f32 %v1892, %v1898
  %v1903 = vmul.f32 %v1893, %v1898
  %v1904 = vld [vmem:[%s8] sm:$0xf]
  %1906 = vset.pattern.permute.xlu0 0
  %1907 = vperm.xlu0 %1906, %v1904
  %v1908 = vpop.permute.xlu0 %1907
  %v1910 = vadd.f32 %v1900, %v1908
  %v1911 = vadd.f32 %v1901, %v1908
  %v1912 = vadd.f32 %v1902, %v1908
  %v1913 = vadd.f32 %v1903, %v1908
  %v1914 = vxor.u32 %v1910, 2147483648
  %v1915 = vxor.u32 %v1911, 2147483648
  %v1916 = vxor.u32 %v1912, 2147483648
  %v1917 = vxor.u32 %v1913, 2147483648
  %v1918 = vmul.f32 %v1914, 1.442695
  %v1919 = vpow.pop %v1918
  %v1920 = vmul.f32 %v1915, 1.442695
  %v1921 = vpow.pop %v1920
  %v1922 = vmul.f32 %v1916, 1.442695
  %v1923 = vpow.pop %v1922
  %v1924 = vmul.f32 %v1917, 1.442695
  %v1925 = vpow.pop %v1924
  %v1926 = vadd.f32 %v1919, 1.0
  %v1927 = vadd.f32 %v1921, 1.0
  %v1928 = vadd.f32 %v1923, 1.0
  %v1929 = vadd.f32 %v1925, 1.0
  %v1930 = vrcp.pop %v1926
  %v1931 = vmul.f32 %v1926, %v1930
  %v1932 = vsub.f32 1.0, %v1931
  %v1933 = vmul.f32 %v1930, %v1932
  %v1934 = vadd.f32 %v1930, %v1933
  %vm1935 = vweird.f32 %v1926
  %vm1936 = vweird.f32 %v1930
  %vm1937 = vmor %vm1935, %vm1936
  %v1938 = vsel %vm1937, %v1930, %v1934
  %v1939 = vand.u32 2147483647, %v1926
  %vm1940 = vcmp.eq.f32.partialorder %v1939, 8.507059e+37
  %v1941 = vand.u32 %v1926, 2147483648
  %v1942 = vor.u32 1.1754944e-38, %v1941
  %v1943 = vsel %vm1940, %v1942, %v1938
  %v1944 = vmul.f32 1.0, %v1943
  %v1945 = vrcp.pop %v1927
  %v1946 = vmul.f32 %v1927, %v1945
  %v1947 = vsub.f32 1.0, %v1946
  %v1948 = vmul.f32 %v1945, %v1947
  %v1949 = vadd.f32 %v1945, %v1948
  %vm1950 = vweird.f32 %v1927
  %vm1951 = vweird.f32 %v1945
  %vm1952 = vmor %vm1950, %vm1951
  %v1953 = vsel %vm1952, %v1945, %v1949
  %v1954 = vand.u32 2147483647, %v1927
  %vm1955 = vcmp.eq.f32.partialorder %v1954, 8.507059e+37
  %v1956 = vand.u32 %v1927, 2147483648
  %v1957 = vor.u32 1.1754944e-38, %v1956
  %v1958 = vsel %vm1955, %v1957, %v1953
  %v1959 = vmul.f32 1.0, %v1958
  %v1960 = vrcp.pop %v1928
  %v1961 = vmul.f32 %v1928, %v1960
  %v1962 = vsub.f32 1.0, %v1961
  %v1963 = vmul.f32 %v1960, %v1962
  %v1964 = vadd.f32 %v1960, %v1963
  %vm1965 = vweird.f32 %v1928
  %vm1966 = vweird.f32 %v1960
  %vm1967 = vmor %vm1965, %vm1966
  %v1968 = vsel %vm1967, %v1960, %v1964
  %v1969 = vand.u32 2147483647, %v1928
  %vm1970 = vcmp.eq.f32.partialorder %v1969, 8.507059e+37
  %v1971 = vand.u32 %v1928, 2147483648
  %v1972 = vor.u32 1.1754944e-38, %v1971
  %v1973 = vsel %vm1970, %v1972, %v1968
  %v1974 = vmul.f32 1.0, %v1973
  %v1975 = vrcp.pop %v1929
  %v1976 = vmul.f32 %v1929, %v1975
  %v1977 = vsub.f32 1.0, %v1976
  %v1978 = vmul.f32 %v1975, %v1977
  %v1979 = vadd.f32 %v1975, %v1978
  %vm1980 = vweird.f32 %v1929
  %vm1981 = vweird.f32 %v1975
  %vm1982 = vmor %vm1980, %vm1981
  %v1983 = vsel %vm1982, %v1975, %v1979
  %v1984 = vand.u32 2147483647, %v1929
  %vm1985 = vcmp.eq.f32.partialorder %v1984, 8.507059e+37
  %v1986 = vand.u32 %v1929, 2147483648
  %v1987 = vor.u32 1.1754944e-38, %v1986
  %v1988 = vsel %vm1985, %v1987, %v1983
  %v1989 = vmul.f32 1.0, %v1988
  %v1990 = vmul.f32 %v1910, %v1944
  %v1991 = vmul.f32 %v1911, %v1959
  %v1992 = vmul.f32 %v1912, %v1974
  %v1993 = vmul.f32 %v1913, %v1989
  %v1998 = vrot.slane %v1991, 4
  %v1999 = vrot.slane %v1993, 4
  %vm2000 = vcmask 1043456
  %v2001 = vsel %vm2000, %v1990, %v1998
  %v2002 = vsel %vm2000, %v1992, %v1999
  %2005 = vst [vmem:[%s9] sm:$0xff] %v2001
  %2006 = vst [vmem:[%s9 + $0x8] sm:$0xff] %v2002
  // Predicated region
  $region38: #{rfem_pallas.1} parent=0 // pred_check
    _
  $region39: #{rfem_pallas.1} parent=0 // pred_check_branch
    %2008 = sbr.rel (0) target = $region41
  $region40: #{rfem_pallas.1} parent=0 // pred_region
    _
  $region41: #{rfem_pallas.1} parent=0 // pred_fallthru
    _
  // Predicated region
  $region42: #{rfem_pallas.1} parent=0 // pred_check
    _
  $region43: #{rfem_pallas.1} parent=0 // pred_check_branch
    %2010 = sbr.rel (0) target = $region45
  $region44: #{rfem_pallas.1} parent=0 // pred_region
    _
  $region45: #{rfem_pallas.1} parent=0 // pred_fallthru
    _

</llo_original>
